<compile_context>
chip_gen: v7x
topology: tpu7x:2x2x1
jax: 0.10.0
libtpu: 0.0.40
codegen_flags: <defaults>
</compile_context>

<pallas_src>
import functools
import math

import jax
import jax.numpy as jnp
from jax.experimental import pallas as pl
from jax.experimental.pallas import tpu as pltpu

LN_EPS = 1e-5


def _layer_norm(h, g_ref, b_ref):
    m = jnp.mean(h, axis=-1, keepdims=True)
    c = h - m
    v = jnp.mean(c * c, axis=-1, keepdims=True)
    return (c * jax.lax.rsqrt(v + LN_EPS)
            * g_ref[...].astype(jnp.float32)
            + b_ref[...].astype(jnp.float32))


def _attention_block_kernel(x_ref,
                            wqkv_ref, bqkv_ref, wout_ref, bout_ref,
                            g1_ref, be1_ref,
                            wff1_ref, bff1_ref, wff2_ref, bff2_ref,
                            g2_ref, be2_ref,
                            o_ref,
                            qkv_ref, ctx_ref,
                            *, num_heads, matmul_dtype):
    Bt, S, E = x_ref.shape
    H = num_heads
    D = E // H
    R = Bt * S

    def mm(a, b):
        # bf16 operands, fp32 accumulation on the MXU (weights already bf16).
        return jnp.dot(a.astype(matmul_dtype), b.astype(matmul_dtype),
                       preferred_element_type=jnp.float32)

    x = x_ref[...].reshape(R, E).astype(jnp.float32)            # (R, E)

    # ---- fused QKV in-projection (q scale pre-folded into weights) ----
    # Parked in VMEM scratch so the (R, 3E) value is not live across the
    # unrolled head loop.
    qkv_ref[...] = mm(x, wqkv_ref[...]) + bqkv_ref[...].astype(jnp.float32)

    # ---- per-(batch, head) scaled-dot-product attention ----
    # Each head's context is written into its column slab of ctx_ref; the
    # out-projection is then ONE K=E matmul instead of H K=D matmuls.
    for b in range(Bt):                       # static loops, traced once
        rows = slice(b * S, (b + 1) * S)
        for h in range(H):
            lo = h * D
            qh = qkv_ref[rows, lo:lo + D]                        # (S, D)
            kh = qkv_ref[rows, E + lo:E + lo + D]                # (S, D)
            vh = qkv_ref[rows, 2 * E + lo:2 * E + lo + D]        # (S, D)
            s = jax.lax.dot_general(          # q @ k^T -> (S, S), no transpose op
                qh.astype(matmul_dtype), kh.astype(matmul_dtype),
                (((1,), (1,)), ((), ())),
                preferred_element_type=jnp.float32)
            # TODO(synk): key_padding_mask path not wired in (module default None).
            s = s - jnp.max(s, axis=-1, keepdims=True)
            p = jnp.exp(s)                    # attn dropout: eval -> identity
            denom = jnp.sum(p, axis=-1, keepdims=True)
            ctx_h = mm(p, vh)                                    # (S, D)
            # Deferred softmax normalization: scale the (S, D) context with an
            # EUP approx reciprocal instead of S*S divides.
            ctx_ref[rows, lo:lo + D] = ctx_h * pl.reciprocal(denom, approx=True)

    # ---- single K=E out-projection ----
    attn_out = mm(ctx_ref[...], wout_ref[...]) + bout_ref[...].astype(jnp.float32)

    # ---- residual (re-read x from VMEM) + LayerNorm1 (dropout1 = identity) ----
    x_res = x_ref[...].reshape(R, E).astype(jnp.float32)
    h1 = _layer_norm(x_res + attn_out, g1_ref, be1_ref)

    # ---- feed-forward: Linear(E,4E) -> ReLU -> Dropout(id) -> Linear(4E,E) ----
    # TODO(synk): for very large S*E, row-tile this region (inner pl.loop) so the
    # fp32 (R, 4E) intermediate stays bounded on v7x's 64 MiB VMEM.
    f = mm(h1, wff1_ref[...]) + bff1_ref[...].astype(jnp.float32)   # (R, 4E)
    f = jnp.maximum(f, 0.0)
    # TODO(synk): training-mode dropout (pltpu.prng_random_bits mask) not wired in.
    f = mm(f, wff2_ref[...]) + bff2_ref[...].astype(jnp.float32)    # (R, E)

    # ---- residual + LayerNorm2 (dropout2 = identity) ----
    out = _layer_norm(h1 + f, g2_ref, be2_ref)
    o_ref[...] = out.reshape(Bt, S, E).astype(o_ref.dtype)


def _choose_block_batch(B, S, target_rows=256):
    """Largest divisor Bt of B with Bt*S <= target_rows, keeping grid >= 2 when
    possible so both v7x TensorCores get work."""
    best = 1
    for bt in range(1, B + 1):
        if B % bt:
            continue
        if bt * S > target_rows and bt != 1:
            continue
        if B >= 2 and (B // bt) < 2:
            continue
        best = bt
    return best


@functools.partial(jax.jit, static_argnames=("num_heads",))
def attention_block(x, params, num_heads):
    """x: (B, S, E). Fused transformer-encoder-style AttentionBlock, eval mode.
    `params` should come from prepare_params (bf16 weights, q-scale folded)."""
    B, S, E = x.shape
    F = params["w_ff1"].shape[1]
    assert E % num_heads == 0
    matmul_dtype = params["w_qkv"].dtype

    Bt = _choose_block_batch(B, S)
    R = Bt * S
    n_steps = B // Bt

    kernel = functools.partial(_attention_block_kernel,
                               num_heads=num_heads, matmul_dtype=matmul_dtype)

    seq_spec = pl.BlockSpec((Bt, S, E), lambda b: (b, 0, 0))

    def wspec(shape):
        # Constant-index weight/bias blocks: single-buffered (no point paying
        # 2x VMEM for data that never changes across grid steps).
        nd = len(shape)
        return pl.BlockSpec(shape, lambda b, _n=nd: (0,) * _n,
                            pipeline_mode=pl.Buffered(1))

    # ---- VMEM budget (explicit limit: v5e scoped default is only 16 MiB,
    # v7x physical is 64 MiB) ----
    w_item = jnp.dtype(matmul_dtype).itemsize
    weight_bytes = (E * 3 * E + E * E + E * F + F * E) * w_item
    bias_bytes = (3 * E + E + 2 * E + F + E + 2 * E) * 4
    x_bytes = Bt * S * E * x.dtype.itemsize
    scratch_bytes = (R * 3 * E + R * E) * 4
    act_bytes = 4 * x_bytes + scratch_bytes + 2 * R * F * 4
    vmem_limit = int(min(60 * 2**20,
                         max(32 * 2**20,
                             2 * (weight_bytes + bias_bytes + act_bytes))))

    # ---- advisory cost estimate for the XLA scheduler ----
    flops_step = (2 * R * E * 3 * E        # qkv projection
                  + 4 * Bt * S * S * E     # q@k^T and p@v over all heads
                  + 2 * R * E * E          # out projection
                  + 4 * R * E * F)         # feed-forward
    cost = pl.CostEstimate(
        flops=n_steps * flops_step,
        transcendentals=B * num_heads * S * S + B * num_heads * S + 2 * B * S,
        bytes_accessed=2 * B * S * E * x.dtype.itemsize + weight_bytes + bias_bytes)

    return pl.pallas_call(
        kernel,
        out_shape=jax.ShapeDtypeStruct((B, S, E), x.dtype),
        grid_spec=pltpu.PrefetchScalarGridSpec(
            num_scalar_prefetch=0,
            grid=(n_steps,),
            in_specs=[seq_spec,
                      wspec((E, 3 * E)), wspec((1, 3 * E)),
                      wspec((E, E)), wspec((1, E)),
                      wspec((1, E)), wspec((1, E)),
                      wspec((E, F)), wspec((1, F)),
                      wspec((F, E)), wspec((1, E)),
                      wspec((1, E)), wspec((1, E))],
            out_specs=seq_spec,
            scratch_shapes=[pltpu.VMEM((R, 3 * E), jnp.float32),   # qkv
                            pltpu.VMEM((R, E), jnp.float32)],      # ctx
        ),
        compiler_params=pltpu.CompilerParams(
            dimension_semantics=("parallel",),
            vmem_limit_bytes=vmem_limit),
        cost_estimate=cost,
    )(x,
      params["w_qkv"], params["b_qkv"],
      params["w_out"], params["b_out"],
      params["ln1_gamma"], params["ln1_beta"],
      params["w_ff1"], params["b_ff1"],
      params["w_ff2"], params["b_ff2"],
      params["ln2_gamma"], params["ln2_beta"])


def init_params(key, embed_dim, dtype=jnp.float32):
    """Synthetic fp32 params mirroring the PyTorch module. Linear weights are
    stored transposed as (in, out) so the kernel computes x @ W directly."""
    E, F = embed_dim, 4 * embed_dim
    ks = jax.random.split(key, 6)
    bq = 1.0 / math.sqrt(E)
    bf = 1.0 / math.sqrt(F)
    return {
        # nn.MultiheadAttention: in_proj (3E, E) and out_proj (E, E), transposed.
        "w_qkv": jax.random.uniform(ks[0], (E, 3 * E), dtype, -bq, bq),
        "b_qkv": jax.random.uniform(ks[1], (1, 3 * E), dtype, -bq, bq),
        "w_out": jax.random.uniform(ks[2], (E, E), dtype, -bq, bq),
        "b_out": jax.random.uniform(ks[3], (1, E), dtype, -bq, bq),
        "ln1_gamma": jnp.ones((1, E), dtype),
        "ln1_beta": jnp.zeros((1, E), dtype),
        "w_ff1": jax.random.uniform(ks[4], (E, F), dtype, -bq, bq),
        "b_ff1": jnp.zeros((1, F), dtype),
        "w_ff2": jax.random.uniform(ks[5], (F, E), dtype, -bf, bf),
        "b_ff2": jnp.zeros((1, E), dtype),
        "ln2_gamma": jnp.ones((1, E), dtype),
        "ln2_beta": jnp.zeros((1, E), dtype),
    }


def prepare_params(params, num_heads, matmul_dtype=jnp.bfloat16):
    """One-time parameter prep for the kernel:
      * fold 1/sqrt(D) into the q-columns of w_qkv / b_qkv,
      * cast the big weight matrices to bf16 (biases / LN params stay fp32)."""
    E = params["w_out"].shape[0]
    D = E // num_heads
    scale = jnp.float32(1.0 / math.sqrt(D))

    w_qkv = params["w_qkv"].astype(jnp.float32)
    b_qkv = params["b_qkv"].astype(jnp.float32)
    w_qkv = jnp.concatenate([w_qkv[:, :E] * scale, w_qkv[:, E:]], axis=1)
    b_qkv = jnp.concatenate([b_qkv[:, :E] * scale, b_qkv[:, E:]], axis=1)

    return {
        "w_qkv": w_qkv.astype(matmul_dtype),
        "b_qkv": b_qkv,
        "w_out": params["w_out"].astype(matmul_dtype),
        "b_out": params["b_out"].astype(jnp.float32),
        "ln1_gamma": params["ln1_gamma"].astype(jnp.float32),
        "ln1_beta": params["ln1_beta"].astype(jnp.float32),
        "w_ff1": params["w_ff1"].astype(matmul_dtype),
        "b_ff1": params["b_ff1"].astype(jnp.float32),
        "w_ff2": params["w_ff2"].astype(matmul_dtype),
        "b_ff2": params["b_ff2"].astype(jnp.float32),
        "ln2_gamma": params["ln2_gamma"].astype(jnp.float32),
        "ln2_beta": params["ln2_beta"].astype(jnp.float32),
    }


def _reference(x, p, num_heads):
    """Pure-JAX fp32 reference of the PyTorch forward (eval mode, no mask)."""
    B, S, E = x.shape
    D = E // num_heads

    def ln(h, g, b):
        m = jnp.mean(h, axis=-1, keepdims=True)
        v = jnp.mean((h - m) ** 2, axis=-1, keepdims=True)
        return (h - m) / jnp.sqrt(v + LN_EPS) * g + b

    qkv = x @ p["w_qkv"] + p["b_qkv"][0]
    q, k, v = jnp.split(qkv, 3, axis=-1)
    split = lambda t: t.reshape(B, S, num_heads, D).transpose(0, 2, 1, 3)
    qh, kh, vh = split(q), split(k), split(v)
    s = jnp.einsum("bhqd,bhkd->bhqk", qh, kh) / math.sqrt(D)
    a = jax.nn.softmax(s, axis=-1)
    ctx = jnp.einsum("bhqk,bhkd->bhqd", a, vh).transpose(0, 2, 1, 3).reshape(B, S, E)
    attn_out = ctx @ p["w_out"] + p["b_out"][0]
    h = ln(x + attn_out, p["ln1_gamma"][0], p["ln1_beta"][0])
    f = jnp.maximum(h @ p["w_ff1"] + p["b_ff1"][0], 0.0)
    f = f @ p["w_ff2"] + p["b_ff2"][0]
    return ln(h + f, p["ln2_gamma"][0], p["ln2_beta"][0])


if __name__ == "__main__":
    key = jax.random.PRNGKey(0)
    kx, kp = jax.random.split(key)

    batch, seq, embed_dim, num_heads = 2, 8, 128, 4
    x = jax.random.normal(kx, (batch, seq, embed_dim), dtype=jnp.float32)

    raw_params = init_params(kp, embed_dim)                      # fp32 (PyTorch-like)
    kernel_params = prepare_params(raw_params, num_heads)        # bf16 weights, folded scale

    out = attention_block(x, kernel_params, num_heads=num_heads)
    out = jax.block_until_ready(out)

    ref = _reference(x, raw_params, num_heads)
    assert out.shape == x.shape
    max_err = float(jnp.max(jnp.abs(out - ref)))
    # bf16-operand / fp32-accumulate MXU path vs fp32 reference.
    assert max_err < 5e-2, max_err

    print("KERNEL_OK")
</pallas_src>

<mosaic_0001>
module attributes {stable_mosaic.version = 11 : i64} {
  func.func @_attention_block_kernel(%arg0: i32, %arg1: memref<1x8x128xf32, #tpu.memory_space<vmem>>, %arg2: memref<128x384xbf16, #tpu.memory_space<vmem>>, %arg3: memref<1x384xf32, #tpu.memory_space<vmem>>, %arg4: memref<128x128xbf16, #tpu.memory_space<vmem>>, %arg5: memref<1x128xf32, #tpu.memory_space<vmem>>, %arg6: memref<1x128xf32, #tpu.memory_space<vmem>>, %arg7: memref<1x128xf32, #tpu.memory_space<vmem>>, %arg8: memref<128x512xbf16, #tpu.memory_space<vmem>>, %arg9: memref<1x512xf32, #tpu.memory_space<vmem>>, %arg10: memref<512x128xbf16, #tpu.memory_space<vmem>>, %arg11: memref<1x128xf32, #tpu.memory_space<vmem>>, %arg12: memref<1x128xf32, #tpu.memory_space<vmem>>, %arg13: memref<1x128xf32, #tpu.memory_space<vmem>>, %arg14: memref<1x8x128xf32, #tpu.memory_space<vmem>>, %arg15: memref<8x384xf32, #tpu.memory_space<vmem>>, %arg16: memref<8x128xf32, #tpu.memory_space<vmem>>) attributes {dimension_semantics = [#tpu.dimension_semantics<parallel>], iteration_bounds = array<i64: 2>, scalar_prefetch = 0 : i64, scratch_operands = 2 : i64, tpu.core_type = #tpu.core_type<tc>, window_params = [{transform_indices = @transform_0, window_bounds = array<i64: 1, 8, 128>}, {pipeline_mode = #tpu.pipeline_mode<synchronous>, transform_indices = @transform_1, window_bounds = array<i64: 128, 384>}, {pipeline_mode = #tpu.pipeline_mode<synchronous>, transform_indices = @transform_2, window_bounds = array<i64: 1, 384>}, {pipeline_mode = #tpu.pipeline_mode<synchronous>, transform_indices = @transform_3, window_bounds = array<i64: 128, 128>}, {pipeline_mode = #tpu.pipeline_mode<synchronous>, transform_indices = @transform_4, window_bounds = array<i64: 1, 128>}, {pipeline_mode = #tpu.pipeline_mode<synchronous>, transform_indices = @transform_5, window_bounds = array<i64: 1, 128>}, {pipeline_mode = #tpu.pipeline_mode<synchronous>, transform_indices = @transform_6, window_bounds = array<i64: 1, 128>}, {pipeline_mode = #tpu.pipeline_mode<synchronous>, transform_indices = @transform_7, window_bounds = array<i64: 128, 512>}, {pipeline_mode = #tpu.pipeline_mode<synchronous>, transform_indices = @transform_8, window_bounds = array<i64: 1, 512>}, {pipeline_mode = #tpu.pipeline_mode<synchronous>, transform_indices = @transform_9, window_bounds = array<i64: 512, 128>}, {pipeline_mode = #tpu.pipeline_mode<synchronous>, transform_indices = @transform_10, window_bounds = array<i64: 1, 128>}, {pipeline_mode = #tpu.pipeline_mode<synchronous>, transform_indices = @transform_11, window_bounds = array<i64: 1, 128>}, {pipeline_mode = #tpu.pipeline_mode<synchronous>, transform_indices = @transform_12, window_bounds = array<i64: 1, 128>}, {transform_indices = @transform_13, window_bounds = array<i64: 1, 8, 128>}]} {
    %c0 = arith.constant 0 : index
    %c0_0 = arith.constant 0 : index
    %c0_1 = arith.constant 0 : index
    %0 = vector.load %arg1[%c0, %c0_0, %c0_1] : memref<1x8x128xf32, #tpu.memory_space<vmem>>, vector<1x8x128xf32>
    %1 = vector.shape_cast %0 : vector<1x8x128xf32> to vector<8x128xf32>
    %c0_2 = arith.constant 0 : index
    %c0_3 = arith.constant 0 : index
    %2 = vector.load %arg2[%c0_2, %c0_3] : memref<128x384xbf16, #tpu.memory_space<vmem>>, vector<128x384xbf16>
    %3 = arith.truncf %1 : vector<8x128xf32> to vector<8x128xbf16>
    %cst = arith.constant dense<0.000000e+00> : vector<8x384xf32>
    %4 = tpu.matmul %3, %2, %cst {dimension_numbers = #tpu.dot_dimension_numbers<[1], [0], [0], [1], [0, 0, 1, 1], [], []>} : vector<8x128xbf16>, vector<128x384xbf16>, vector<8x384xf32> -> vector<8x384xf32>
    %c0_4 = arith.constant 0 : index
    %c0_5 = arith.constant 0 : index
    %5 = vector.load %arg3[%c0_4, %c0_5] : memref<1x384xf32, #tpu.memory_space<vmem>>, vector<1x384xf32>
    %6 = vector.broadcast %5 : vector<1x384xf32> to vector<8x384xf32>
    %7 = arith.addf %4, %6 : vector<8x384xf32>
    %c0_6 = arith.constant 0 : index
    %c0_7 = arith.constant 0 : index
    %8 = vector.load %arg15[%c0_6, %c0_7] : memref<8x384xf32, #tpu.memory_space<vmem>>, vector<8x384xf32>
    tpu.vector_store %arg15[%c0_6, %c0_7], %7 {strides = array<i32>} : memref<8x384xf32, #tpu.memory_space<vmem>>, vector<8x384xf32>,
    %c0_8 = arith.constant 0 : index
    %c0_9 = arith.constant 0 : index
    %9 = vector.load %arg15[%c0_8, %c0_9] : memref<8x384xf32, #tpu.memory_space<vmem>>, vector<8x32xf32>
    %c0_10 = arith.constant 0 : index
    %c128 = arith.constant 128 : index
    %10 = vector.load %arg15[%c0_10, %c128] : memref<8x384xf32, #tpu.memory_space<vmem>>, vector<8x32xf32>
    %c0_11 = arith.constant 0 : index
    %c256 = arith.constant 256 : index
    %11 = vector.load %arg15[%c0_11, %c256] : memref<8x384xf32, #tpu.memory_space<vmem>>, vector<8x32xf32>
    %12 = arith.truncf %9 : vector<8x32xf32> to vector<8x32xbf16>
    %13 = arith.truncf %10 : vector<8x32xf32> to vector<8x32xbf16>
    %cst_12 = arith.constant dense<0.000000e+00> : vector<8x8xf32>
    %14 = tpu.matmul %12, %13, %cst_12 {dimension_numbers = #tpu.dot_dimension_numbers<[1], [1], [0], [0], [0, 0, 1, 0], [], []>} : vector<8x32xbf16>, vector<8x32xbf16>, vector<8x8xf32> -> vector<8x8xf32>
    %cst_13 = arith.constant dense<0xFF800000> : vector<8xf32>
    %15 = vector.multi_reduction <maximumf>, %14, %cst_13 [1] : vector<8x8xf32> to vector<8xf32>
    %16 = vector.shape_cast %15 : vector<8xf32> to vector<8x1xf32>
    %17 = vector.broadcast %16 : vector<8x1xf32> to vector<8x8xf32>
    %18 = arith.subf %14, %17 : vector<8x8xf32>
    %19 = math.exp %18 : vector<8x8xf32>
    %cst_14 = arith.constant dense<0.000000e+00> : vector<8xf32>
    %20 = vector.multi_reduction <add>, %19, %cst_14 [1] : vector<8x8xf32> to vector<8xf32>
    %21 = vector.shape_cast %20 : vector<8xf32> to vector<8x1xf32>
    %22 = arith.truncf %19 : vector<8x8xf32> to vector<8x8xbf16>
    %23 = arith.truncf %11 : vector<8x32xf32> to vector<8x32xbf16>
    %cst_15 = arith.constant dense<0.000000e+00> : vector<8x32xf32>
    %24 = tpu.matmul %22, %23, %cst_15 {dimension_numbers = #tpu.dot_dimension_numbers<[1], [0], [0], [1], [0, 0, 1, 1], [], []>} : vector<8x8xbf16>, vector<8x32xbf16>, vector<8x32xf32> -> vector<8x32xf32>
    %25 = tpu.reciprocal %21 {approx = true} : vector<8x1xf32> -> vector<8x1xf32>
    %26 = vector.broadcast %25 : vector<8x1xf32> to vector<8x32xf32>
    %27 = arith.mulf %24, %26 : vector<8x32xf32>
    %c0_16 = arith.constant 0 : index
    %c0_17 = arith.constant 0 : index
    %28 = vector.load %arg16[%c0_16, %c0_17] : memref<8x128xf32, #tpu.memory_space<vmem>>, vector<8x32xf32>
    tpu.vector_store %arg16[%c0_16, %c0_17], %27 {strides = array<i32>} : memref<8x128xf32, #tpu.memory_space<vmem>>, vector<8x32xf32>,
    %c0_18 = arith.constant 0 : index
    %c32 = arith.constant 32 : index
    %29 = vector.load %arg15[%c0_18, %c32] : memref<8x384xf32, #tpu.memory_space<vmem>>, vector<8x32xf32>
    %c0_19 = arith.constant 0 : index
    %c160 = arith.constant 160 : index
    %30 = vector.load %arg15[%c0_19, %c160] : memref<8x384xf32, #tpu.memory_space<vmem>>, vector<8x32xf32>
    %c0_20 = arith.constant 0 : index
    %c288 = arith.constant 288 : index
    %31 = vector.load %arg15[%c0_20, %c288] : memref<8x384xf32, #tpu.memory_space<vmem>>, vector<8x32xf32>
    %32 = arith.truncf %29 : vector<8x32xf32> to vector<8x32xbf16>
    %33 = arith.truncf %30 : vector<8x32xf32> to vector<8x32xbf16>
    %cst_21 = arith.constant dense<0.000000e+00> : vector<8x8xf32>
    %34 = tpu.matmul %32, %33, %cst_21 {dimension_numbers = #tpu.dot_dimension_numbers<[1], [1], [0], [0], [0, 0, 1, 0], [], []>} : vector<8x32xbf16>, vector<8x32xbf16>, vector<8x8xf32> -> vector<8x8xf32>
    %cst_22 = arith.constant dense<0xFF800000> : vector<8xf32>
    %35 = vector.multi_reduction <maximumf>, %34, %cst_22 [1] : vector<8x8xf32> to vector<8xf32>
    %36 = vector.shape_cast %35 : vector<8xf32> to vector<8x1xf32>
    %37 = vector.broadcast %36 : vector<8x1xf32> to vector<8x8xf32>
    %38 = arith.subf %34, %37 : vector<8x8xf32>
    %39 = math.exp %38 : vector<8x8xf32>
    %cst_23 = arith.constant dense<0.000000e+00> : vector<8xf32>
    %40 = vector.multi_reduction <add>, %39, %cst_23 [1] : vector<8x8xf32> to vector<8xf32>
    %41 = vector.shape_cast %40 : vector<8xf32> to vector<8x1xf32>
    %42 = arith.truncf %39 : vector<8x8xf32> to vector<8x8xbf16>
    %43 = arith.truncf %31 : vector<8x32xf32> to vector<8x32xbf16>
    %cst_24 = arith.constant dense<0.000000e+00> : vector<8x32xf32>
    %44 = tpu.matmul %42, %43, %cst_24 {dimension_numbers = #tpu.dot_dimension_numbers<[1], [0], [0], [1], [0, 0, 1, 1], [], []>} : vector<8x8xbf16>, vector<8x32xbf16>, vector<8x32xf32> -> vector<8x32xf32>
    %45 = tpu.reciprocal %41 {approx = true} : vector<8x1xf32> -> vector<8x1xf32>
    %46 = vector.broadcast %45 : vector<8x1xf32> to vector<8x32xf32>
    %47 = arith.mulf %44, %46 : vector<8x32xf32>
    %c0_25 = arith.constant 0 : index
    %c32_26 = arith.constant 32 : index
    %48 = vector.load %arg16[%c0_25, %c32_26] : memref<8x128xf32, #tpu.memory_space<vmem>>, vector<8x32xf32>
    tpu.vector_store %arg16[%c0_25, %c32_26], %47 {strides = array<i32>} : memref<8x128xf32, #tpu.memory_space<vmem>>, vector<8x32xf32>,
    %c0_27 = arith.constant 0 : index
    %c64 = arith.constant 64 : index
    %49 = vector.load %arg15[%c0_27, %c64] : memref<8x384xf32, #tpu.memory_space<vmem>>, vector<8x32xf32>
    %c0_28 = arith.constant 0 : index
    %c192 = arith.constant 192 : index
    %50 = vector.load %arg15[%c0_28, %c192] : memref<8x384xf32, #tpu.memory_space<vmem>>, vector<8x32xf32>
    %c0_29 = arith.constant 0 : index
    %c320 = arith.constant 320 : index
    %51 = vector.load %arg15[%c0_29, %c320] : memref<8x384xf32, #tpu.memory_space<vmem>>, vector<8x32xf32>
    %52 = arith.truncf %49 : vector<8x32xf32> to vector<8x32xbf16>
    %53 = arith.truncf %50 : vector<8x32xf32> to vector<8x32xbf16>
    %cst_30 = arith.constant dense<0.000000e+00> : vector<8x8xf32>
    %54 = tpu.matmul %52, %53, %cst_30 {dimension_numbers = #tpu.dot_dimension_numbers<[1], [1], [0], [0], [0, 0, 1, 0], [], []>} : vector<8x32xbf16>, vector<8x32xbf16>, vector<8x8xf32> -> vector<8x8xf32>
    %cst_31 = arith.constant dense<0xFF800000> : vector<8xf32>
    %55 = vector.multi_reduction <maximumf>, %54, %cst_31 [1] : vector<8x8xf32> to vector<8xf32>
    %56 = vector.shape_cast %55 : vector<8xf32> to vector<8x1xf32>
    %57 = vector.broadcast %56 : vector<8x1xf32> to vector<8x8xf32>
    %58 = arith.subf %54, %57 : vector<8x8xf32>
    %59 = math.exp %58 : vector<8x8xf32>
    %cst_32 = arith.constant dense<0.000000e+00> : vector<8xf32>
    %60 = vector.multi_reduction <add>, %59, %cst_32 [1] : vector<8x8xf32> to vector<8xf32>
    %61 = vector.shape_cast %60 : vector<8xf32> to vector<8x1xf32>
    %62 = arith.truncf %59 : vector<8x8xf32> to vector<8x8xbf16>
    %63 = arith.truncf %51 : vector<8x32xf32> to vector<8x32xbf16>
    %cst_33 = arith.constant dense<0.000000e+00> : vector<8x32xf32>
    %64 = tpu.matmul %62, %63, %cst_33 {dimension_numbers = #tpu.dot_dimension_numbers<[1], [0], [0], [1], [0, 0, 1, 1], [], []>} : vector<8x8xbf16>, vector<8x32xbf16>, vector<8x32xf32> -> vector<8x32xf32>
    %65 = tpu.reciprocal %61 {approx = true} : vector<8x1xf32> -> vector<8x1xf32>
    %66 = vector.broadcast %65 : vector<8x1xf32> to vector<8x32xf32>
    %67 = arith.mulf %64, %66 : vector<8x32xf32>
    %c0_34 = arith.constant 0 : index
    %c64_35 = arith.constant 64 : index
    %68 = vector.load %arg16[%c0_34, %c64_35] : memref<8x128xf32, #tpu.memory_space<vmem>>, vector<8x32xf32>
    tpu.vector_store %arg16[%c0_34, %c64_35], %67 {strides = array<i32>} : memref<8x128xf32, #tpu.memory_space<vmem>>, vector<8x32xf32>,
    %c0_36 = arith.constant 0 : index
    %c96 = arith.constant 96 : index
    %69 = vector.load %arg15[%c0_36, %c96] : memref<8x384xf32, #tpu.memory_space<vmem>>, vector<8x32xf32>
    %c0_37 = arith.constant 0 : index
    %c224 = arith.constant 224 : index
    %70 = vector.load %arg15[%c0_37, %c224] : memref<8x384xf32, #tpu.memory_space<vmem>>, vector<8x32xf32>
    %c0_38 = arith.constant 0 : index
    %c352 = arith.constant 352 : index
    %71 = vector.load %arg15[%c0_38, %c352] : memref<8x384xf32, #tpu.memory_space<vmem>>, vector<8x32xf32>
    %72 = arith.truncf %69 : vector<8x32xf32> to vector<8x32xbf16>
    %73 = arith.truncf %70 : vector<8x32xf32> to vector<8x32xbf16>
    %cst_39 = arith.constant dense<0.000000e+00> : vector<8x8xf32>
    %74 = tpu.matmul %72, %73, %cst_39 {dimension_numbers = #tpu.dot_dimension_numbers<[1], [1], [0], [0], [0, 0, 1, 0], [], []>} : vector<8x32xbf16>, vector<8x32xbf16>, vector<8x8xf32> -> vector<8x8xf32>
    %cst_40 = arith.constant dense<0xFF800000> : vector<8xf32>
    %75 = vector.multi_reduction <maximumf>, %74, %cst_40 [1] : vector<8x8xf32> to vector<8xf32>
    %76 = vector.shape_cast %75 : vector<8xf32> to vector<8x1xf32>
    %77 = vector.broadcast %76 : vector<8x1xf32> to vector<8x8xf32>
    %78 = arith.subf %74, %77 : vector<8x8xf32>
    %79 = math.exp %78 : vector<8x8xf32>
    %cst_41 = arith.constant dense<0.000000e+00> : vector<8xf32>
    %80 = vector.multi_reduction <add>, %79, %cst_41 [1] : vector<8x8xf32> to vector<8xf32>
    %81 = vector.shape_cast %80 : vector<8xf32> to vector<8x1xf32>
    %82 = arith.truncf %79 : vector<8x8xf32> to vector<8x8xbf16>
    %83 = arith.truncf %71 : vector<8x32xf32> to vector<8x32xbf16>
    %cst_42 = arith.constant dense<0.000000e+00> : vector<8x32xf32>
    %84 = tpu.matmul %82, %83, %cst_42 {dimension_numbers = #tpu.dot_dimension_numbers<[1], [0], [0], [1], [0, 0, 1, 1], [], []>} : vector<8x8xbf16>, vector<8x32xbf16>, vector<8x32xf32> -> vector<8x32xf32>
    %85 = tpu.reciprocal %81 {approx = true} : vector<8x1xf32> -> vector<8x1xf32>
    %86 = vector.broadcast %85 : vector<8x1xf32> to vector<8x32xf32>
    %87 = arith.mulf %84, %86 : vector<8x32xf32>
    %c0_43 = arith.constant 0 : index
    %c96_44 = arith.constant 96 : index
    %88 = vector.load %arg16[%c0_43, %c96_44] : memref<8x128xf32, #tpu.memory_space<vmem>>, vector<8x32xf32>
    tpu.vector_store %arg16[%c0_43, %c96_44], %87 {strides = array<i32>} : memref<8x128xf32, #tpu.memory_space<vmem>>, vector<8x32xf32>,
    %c0_45 = arith.constant 0 : index
    %c0_46 = arith.constant 0 : index
    %89 = vector.load %arg16[%c0_45, %c0_46] : memref<8x128xf32, #tpu.memory_space<vmem>>, vector<8x128xf32>
    %c0_47 = arith.constant 0 : index
    %c0_48 = arith.constant 0 : index
    %90 = vector.load %arg4[%c0_47, %c0_48] : memref<128x128xbf16, #tpu.memory_space<vmem>>, vector<128x128xbf16>
    %91 = arith.truncf %89 : vector<8x128xf32> to vector<8x128xbf16>
    %cst_49 = arith.constant dense<0.000000e+00> : vector<8x128xf32>
    %92 = tpu.matmul %91, %90, %cst_49 {dimension_numbers = #tpu.dot_dimension_numbers<[1], [0], [0], [1], [0, 0, 1, 1], [], []>} : vector<8x128xbf16>, vector<128x128xbf16>, vector<8x128xf32> -> vector<8x128xf32>
    %c0_50 = arith.constant 0 : index
    %c0_51 = arith.constant 0 : index
    %93 = vector.load %arg5[%c0_50, %c0_51] : memref<1x128xf32, #tpu.memory_space<vmem>>, vector<1x128xf32>
    %94 = vector.broadcast %93 : vector<1x128xf32> to vector<8x128xf32>
    %95 = arith.addf %92, %94 : vector<8x128xf32>
    %c0_52 = arith.constant 0 : index
    %c0_53 = arith.constant 0 : index
    %c0_54 = arith.constant 0 : index
    %96 = vector.load %arg1[%c0_52, %c0_53, %c0_54] : memref<1x8x128xf32, #tpu.memory_space<vmem>>, vector<1x8x128xf32>
    %97 = vector.shape_cast %96 : vector<1x8x128xf32> to vector<8x128xf32>
    %98 = arith.addf %97, %95 : vector<8x128xf32>
    %cst_55 = arith.constant dense<0.000000e+00> : vector<8xf32>
    %99 = vector.multi_reduction <add>, %98, %cst_55 [1] : vector<8x128xf32> to vector<8xf32>
    %100 = vector.shape_cast %99 : vector<8xf32> to vector<8x1xf32>
    %cst_56 = arith.constant 1.280000e+02 : f32
    %101 = vector.broadcast %cst_56 : f32 to vector<8x1xf32>
    %102 = arith.divf %100, %101 : vector<8x1xf32>
    %103 = vector.broadcast %102 : vector<8x1xf32> to vector<8x128xf32>
    %104 = arith.subf %98, %103 : vector<8x128xf32>
    %105 = arith.mulf %104, %104 : vector<8x128xf32>
    %cst_57 = arith.constant dense<0.000000e+00> : vector<8xf32>
    %106 = vector.multi_reduction <add>, %105, %cst_57 [1] : vector<8x128xf32> to vector<8xf32>
    %107 = vector.shape_cast %106 : vector<8xf32> to vector<8x1xf32>
    %cst_58 = arith.constant 1.280000e+02 : f32
    %108 = vector.broadcast %cst_58 : f32 to vector<8x1xf32>
    %109 = arith.divf %107, %108 : vector<8x1xf32>
    %cst_59 = arith.constant 9.99999974E-6 : f32
    %110 = vector.broadcast %cst_59 : f32 to vector<8x1xf32>
    %111 = arith.addf %109, %110 : vector<8x1xf32>
    %112 = math.rsqrt %111 : vector<8x1xf32>
    %113 = vector.broadcast %112 : vector<8x1xf32> to vector<8x128xf32>
    %114 = arith.mulf %104, %113 : vector<8x128xf32>
    %c0_60 = arith.constant 0 : index
    %c0_61 = arith.constant 0 : index
    %115 = vector.load %arg6[%c0_60, %c0_61] : memref<1x128xf32, #tpu.memory_space<vmem>>, vector<1x128xf32>
    %116 = vector.broadcast %115 : vector<1x128xf32> to vector<8x128xf32>
    %117 = arith.mulf %114, %116 : vector<8x128xf32>
    %c0_62 = arith.constant 0 : index
    %c0_63 = arith.constant 0 : index
    %118 = vector.load %arg7[%c0_62, %c0_63] : memref<1x128xf32, #tpu.memory_space<vmem>>, vector<1x128xf32>
    %119 = vector.broadcast %118 : vector<1x128xf32> to vector<8x128xf32>
    %120 = arith.addf %117, %119 : vector<8x128xf32>
    %c0_64 = arith.constant 0 : index
    %c0_65 = arith.constant 0 : index
    %121 = vector.load %arg8[%c0_64, %c0_65] : memref<128x512xbf16, #tpu.memory_space<vmem>>, vector<128x512xbf16>
    %122 = arith.truncf %120 : vector<8x128xf32> to vector<8x128xbf16>
    %cst_66 = arith.constant dense<0.000000e+00> : vector<8x512xf32>
    %123 = tpu.matmul %122, %121, %cst_66 {dimension_numbers = #tpu.dot_dimension_numbers<[1], [0], [0], [1], [0, 0, 1, 1], [], []>} : vector<8x128xbf16>, vector<128x512xbf16>, vector<8x512xf32> -> vector<8x512xf32>
    %c0_67 = arith.constant 0 : index
    %c0_68 = arith.constant 0 : index
    %124 = vector.load %arg9[%c0_67, %c0_68] : memref<1x512xf32, #tpu.memory_space<vmem>>, vector<1x512xf32>
    %125 = vector.broadcast %124 : vector<1x512xf32> to vector<8x512xf32>
    %126 = arith.addf %123, %125 : vector<8x512xf32>
    %cst_69 = arith.constant 0.000000e+00 : f32
    %127 = vector.broadcast %cst_69 : f32 to vector<8x512xf32>
    %128 = arith.maximumf %126, %127 : vector<8x512xf32>
    %c0_70 = arith.constant 0 : index
    %c0_71 = arith.constant 0 : index
    %129 = vector.load %arg10[%c0_70, %c0_71] : memref<512x128xbf16, #tpu.memory_space<vmem>>, vector<512x128xbf16>
    %130 = arith.truncf %128 : vector<8x512xf32> to vector<8x512xbf16>
    %cst_72 = arith.constant dense<0.000000e+00> : vector<8x128xf32>
    %131 = tpu.matmul %130, %129, %cst_72 {dimension_numbers = #tpu.dot_dimension_numbers<[1], [0], [0], [1], [0, 0, 1, 1], [], []>} : vector<8x512xbf16>, vector<512x128xbf16>, vector<8x128xf32> -> vector<8x128xf32>
    %c0_73 = arith.constant 0 : index
    %c0_74 = arith.constant 0 : index
    %132 = vector.load %arg11[%c0_73, %c0_74] : memref<1x128xf32, #tpu.memory_space<vmem>>, vector<1x128xf32>
    %133 = vector.broadcast %132 : vector<1x128xf32> to vector<8x128xf32>
    %134 = arith.addf %131, %133 : vector<8x128xf32>
    %135 = arith.addf %120, %134 : vector<8x128xf32>
    %cst_75 = arith.constant dense<0.000000e+00> : vector<8xf32>
    %136 = vector.multi_reduction <add>, %135, %cst_75 [1] : vector<8x128xf32> to vector<8xf32>
    %137 = vector.shape_cast %136 : vector<8xf32> to vector<8x1xf32>
    %cst_76 = arith.constant 1.280000e+02 : f32
    %138 = vector.broadcast %cst_76 : f32 to vector<8x1xf32>
    %139 = arith.divf %137, %138 : vector<8x1xf32>
    %140 = vector.broadcast %139 : vector<8x1xf32> to vector<8x128xf32>
    %141 = arith.subf %135, %140 : vector<8x128xf32>
    %142 = arith.mulf %141, %141 : vector<8x128xf32>
    %cst_77 = arith.constant dense<0.000000e+00> : vector<8xf32>
    %143 = vector.multi_reduction <add>, %142, %cst_77 [1] : vector<8x128xf32> to vector<8xf32>
    %144 = vector.shape_cast %143 : vector<8xf32> to vector<8x1xf32>
    %cst_78 = arith.constant 1.280000e+02 : f32
    %145 = vector.broadcast %cst_78 : f32 to vector<8x1xf32>
    %146 = arith.divf %144, %145 : vector<8x1xf32>
    %cst_79 = arith.constant 9.99999974E-6 : f32
    %147 = vector.broadcast %cst_79 : f32 to vector<8x1xf32>
    %148 = arith.addf %146, %147 : vector<8x1xf32>
    %149 = math.rsqrt %148 : vector<8x1xf32>
    %150 = vector.broadcast %149 : vector<8x1xf32> to vector<8x128xf32>
    %151 = arith.mulf %141, %150 : vector<8x128xf32>
    %c0_80 = arith.constant 0 : index
    %c0_81 = arith.constant 0 : index
    %152 = vector.load %arg12[%c0_80, %c0_81] : memref<1x128xf32, #tpu.memory_space<vmem>>, vector<1x128xf32>
    %153 = vector.broadcast %152 : vector<1x128xf32> to vector<8x128xf32>
    %154 = arith.mulf %151, %153 : vector<8x128xf32>
    %c0_82 = arith.constant 0 : index
    %c0_83 = arith.constant 0 : index
    %155 = vector.load %arg13[%c0_82, %c0_83] : memref<1x128xf32, #tpu.memory_space<vmem>>, vector<1x128xf32>
    %156 = vector.broadcast %155 : vector<1x128xf32> to vector<8x128xf32>
    %157 = arith.addf %154, %156 : vector<8x128xf32>
    %158 = vector.shape_cast %157 : vector<8x128xf32> to vector<1x8x128xf32>
    %c0_84 = arith.constant 0 : index
    %c0_85 = arith.constant 0 : index
    %c0_86 = arith.constant 0 : index
    %159 = vector.load %arg14[%c0_84, %c0_85, %c0_86] : memref<1x8x128xf32, #tpu.memory_space<vmem>>, vector<1x8x128xf32>
    tpu.vector_store %arg14[%c0_84, %c0_85, %c0_86], %158 {strides = array<i32>} : memref<1x8x128xf32, #tpu.memory_space<vmem>>, vector<1x8x128xf32>,
    return
  }
  func.func @transform_0(%arg0: i32) -> (i32, i32, i32) {
    %c0_i32 = arith.constant 0 : i32
    %c0_i32_0 = arith.constant 0 : i32
    %c0_i32_1 = arith.constant 0 : i32
    return %arg0, %c0_i32, %c0_i32_0 : i32, i32, i32
  }
  func.func @transform_1(%arg0: i32) -> (i32, i32) {
    %c0_i32 = arith.constant 0 : i32
    %c0_i32_0 = arith.constant 0 : i32
    %c0_i32_1 = arith.constant 0 : i32
    return %c0_i32, %c0_i32_0 : i32, i32
  }
  func.func @transform_2(%arg0: i32) -> (i32, i32) {
    %c0_i32 = arith.constant 0 : i32
    %c0_i32_0 = arith.constant 0 : i32
    %c0_i32_1 = arith.constant 0 : i32
    return %c0_i32, %c0_i32_0 : i32, i32
  }
  func.func @transform_3(%arg0: i32) -> (i32, i32) {
    %c0_i32 = arith.constant 0 : i32
    %c0_i32_0 = arith.constant 0 : i32
    %c0_i32_1 = arith.constant 0 : i32
    return %c0_i32, %c0_i32_0 : i32, i32
  }
  func.func @transform_4(%arg0: i32) -> (i32, i32) {
    %c0_i32 = arith.constant 0 : i32
    %c0_i32_0 = arith.constant 0 : i32
    %c0_i32_1 = arith.constant 0 : i32
    return %c0_i32, %c0_i32_0 : i32, i32
  }
  func.func @transform_5(%arg0: i32) -> (i32, i32) {
    %c0_i32 = arith.constant 0 : i32
    %c0_i32_0 = arith.constant 0 : i32
    %c0_i32_1 = arith.constant 0 : i32
    return %c0_i32, %c0_i32_0 : i32, i32
  }
  func.func @transform_6(%arg0: i32) -> (i32, i32) {
    %c0_i32 = arith.constant 0 : i32
    %c0_i32_0 = arith.constant 0 : i32
    %c0_i32_1 = arith.constant 0 : i32
    return %c0_i32, %c0_i32_0 : i32, i32
  }
  func.func @transform_7(%arg0: i32) -> (i32, i32) {
    %c0_i32 = arith.constant 0 : i32
    %c0_i32_0 = arith.constant 0 : i32
    %c0_i32_1 = arith.constant 0 : i32
    return %c0_i32, %c0_i32_0 : i32, i32
  }
  func.func @transform_8(%arg0: i32) -> (i32, i32) {
    %c0_i32 = arith.constant 0 : i32
    %c0_i32_0 = arith.constant 0 : i32
    %c0_i32_1 = arith.constant 0 : i32
    return %c0_i32, %c0_i32_0 : i32, i32
  }
  func.func @transform_9(%arg0: i32) -> (i32, i32) {
    %c0_i32 = arith.constant 0 : i32
    %c0_i32_0 = arith.constant 0 : i32
    %c0_i32_1 = arith.constant 0 : i32
    return %c0_i32, %c0_i32_0 : i32, i32
  }
  func.func @transform_10(%arg0: i32) -> (i32, i32) {
    %c0_i32 = arith.constant 0 : i32
    %c0_i32_0 = arith.constant 0 : i32
    %c0_i32_1 = arith.constant 0 : i32
    return %c0_i32, %c0_i32_0 : i32, i32
  }
  func.func @transform_11(%arg0: i32) -> (i32, i32) {
    %c0_i32 = arith.constant 0 : i32
    %c0_i32_0 = arith.constant 0 : i32
    %c0_i32_1 = arith.constant 0 : i32
    return %c0_i32, %c0_i32_0 : i32, i32
  }
  func.func @transform_12(%arg0: i32) -> (i32, i32) {
    %c0_i32 = arith.constant 0 : i32
    %c0_i32_0 = arith.constant 0 : i32
    %c0_i32_1 = arith.constant 0 : i32
    return %c0_i32, %c0_i32_0 : i32, i32
  }
  func.func @transform_13(%arg0: i32) -> (i32, i32, i32) {
    %c0_i32 = arith.constant 0 : i32
    %c0_i32_0 = arith.constant 0 : i32
    %c0_i32_1 = arith.constant 0 : i32
    return %arg0, %c0_i32, %c0_i32_0 : i32, i32, i32
  }
}

</mosaic_0001>

<llo_original>
// kernel: attention_block.1
$region0: #{attention_block.1}
  #allocation0 [shape = 'u32[]', space=smem, size = 0x4, offset = 0x4, fixed_abs, tag = 'smem constant byte address 0x4 - core index']
  #allocation1 [shape = 'u32[144,128]{1,0:T(1,128)}', space=vmem, size = 0x12000, scoped, tag = 'internal scratch']
  #allocation2 [shape = 'f32[8,384]{1,0:T(8,128)}', space=vmem, size = 0x3000, scoped, tag = 'scratch operand']
  #allocation3 [shape = 'f32[8,128]{1,0:T(8,128)}', space=vmem, size = 0x1000, scoped, tag = 'scratch operand']
  %s0 = inlined_call_operand.hbm [shape: f32[2,8,128], index: 0, kind: input, shape index: {}]
  %s1 = inlined_call_operand.hbm [shape: bf16[128,384], index: 1, kind: input, shape index: {}]
  %s2 = inlined_call_operand.vmem [shape: f32[1,384], index: 2, kind: input, shape index: {}]
  %s3 = inlined_call_operand.hbm [shape: bf16[128,128], index: 3, kind: input, shape index: {}]
  %s4 = inlined_call_operand.vmem [shape: f32[1,128], index: 4, kind: input, shape index: {}]
  %s5 = inlined_call_operand.vmem [shape: f32[1,128], index: 5, kind: input, shape index: {}]
  %s6 = inlined_call_operand.vmem [shape: f32[1,128], index: 6, kind: input, shape index: {}]
  %s7 = inlined_call_operand.hbm [shape: bf16[128,512], index: 7, kind: input, shape index: {}]
  %s8 = inlined_call_operand.hbm [shape: f32[1,512], index: 8, kind: input, shape index: {}]
  %s9 = inlined_call_operand.hbm [shape: bf16[512,128], index: 9, kind: input, shape index: {}]
  %s10 = inlined_call_operand.vmem [shape: f32[1,128], index: 10, kind: input, shape index: {}]
  %s11 = inlined_call_operand.vmem [shape: f32[1,128], index: 11, kind: input, shape index: {}]
  %s12 = inlined_call_operand.vmem [shape: f32[1,128], index: 12, kind: input, shape index: {}]
  %s13 = inlined_call_operand.hbm [shape: f32[2,8,128], index: 13, kind: output, shape index: {}]
  %s14 = sld [smem:[#allocation0]]
  $region109: #{attention_block.1} parent=0
    _
  %s16 = ssub.s32 1, %s14
  %s17 = scalar_select 0, %s16, %s14
  $region1: #{attention_block.1} parent=0
    #allocation4 [shape = 'u8[8192]{0}', space=vmem, size = 0x2000, scoped, tag = 'input window, operand 0']
    #allocation5 [shape = 's32[2]{0}', space=sflag, size = 0x8, scoped, tag = 'scoped memory for attention_block.1']
    #allocation6 [shape = 's32[2]{0}', space=sflag, size = 0x8, scoped, tag = 'scoped memory for attention_block.1']
    #allocation7 [shape = 'u8[98304]{0}', space=vmem, size = 0x18000, scoped, tag = 'input window, operand 1, single buffered']
    #allocation8 [shape = 's32[1]{0}', space=sflag, size = 0x4, scoped, tag = 'scoped memory for attention_block.1']
    #allocation9 [shape = 'u8[32768]{0}', space=vmem, size = 0x8000, scoped, tag = 'input window, operand 3, single buffered']
    #allocation10 [shape = 'u8[131072]{0}', space=vmem, size = 0x20000, scoped, tag = 'input window, operand 7, single buffered']
    #allocation11 [shape = 's32[1]{0}', space=sflag, size = 0x4, scoped, tag = 'scoped memory for attention_block.1']
    #allocation12 [shape = 'u8[2048]{0}', space=vmem, size = 0x800, scoped, tag = 'input window, operand 8, single buffered']
    #allocation13 [shape = 'u8[131072]{0}', space=vmem, size = 0x20000, scoped, tag = 'input window, operand 9, single buffered']
    #allocation14 [shape = 's32[1]{0}', space=sflag, size = 0x4, scoped, tag = 'scoped memory for attention_block.1']
    #allocation15 [shape = 'u8[8192]{0}', space=vmem, size = 0x2000, scoped, tag = 'output window, operand 0']
    %18 = vsyncpa [#allocation5], 0
    %s19 = scalar_lea.sflag [#allocation5], 1
    %20 = vsyncpa %s19, 0
    %21 = vsyncpa [#allocation8], 0
    %22 = vsyncpa [#allocation11], 0
    %23 = vsyncpa [#allocation14], 0
    %24 = vsyncpa [#allocation6], 0
    %s25 = scalar_lea.sflag [#allocation6], 1
    %26 = vsyncpa %s25, 0
    loop: start=0, step=1, limit=4
    $region2: #{attention_block.1} parent=1 // loop_pre_header
      _
    $region3: #{attention_block.1} parent=1 // loop_header
      %s28 = sphi 0, %s32
      %p29 = scmp.ge.s32.totalorder %s28, 4
      %s38 = sphi 0, %s40
      %s41 = sphi 0, %s38
      %s42 = sphi 0, %s41
      %s58 = sphi 0, %s42
      %s62 = sphi 0, %s62
      %s64 = sphi 0, %s62
      %s65 = sphi 0, %s64
      %s79 = sphi 0, %s65
      %s83 = sphi 0, %s83
      %s85 = sphi 0, %s83
      %s86 = sphi 0, %s85
      %s100 = sphi 0, %s86
      %s104 = sphi 0, %s104
      %s106 = sphi 0, %s104
      %s107 = sphi 0, %s106
      %s121 = sphi 0, %s107
      %s125 = sphi 0, %s125
      %s127 = sphi 0, %s125
      %s128 = sphi 0, %s127
      %s142 = sphi 0, %s128
      %s146 = sphi 0, %s146
      %s148 = sphi 0, %s146
      %s149 = sphi 0, %s148
      %s163 = sphi 0, %s149
      %s167 = sphi 0, %s167
      %s169 = sphi 0, %s167
      %s170 = sphi 0, %s169
      %s184 = sphi 0, %s170
      %s188 = sphi 0, %s188
      %s190 = sphi 0, %s188
      %s191 = sphi 0, %s190
      %s205 = sphi 0, %s191
      %s209 = sphi 0, %s209
      %s211 = sphi 0, %s209
      %s212 = sphi 0, %s211
      %s226 = sphi 0, %s212
      %s230 = sphi 0, %s230
      %s232 = sphi 0, %s230
      %s233 = sphi 0, %s232
      %s247 = sphi 0, %s233
      %s251 = sphi 0, %s251
      %s253 = sphi 0, %s251
      %s254 = sphi 0, %s253
      %s268 = sphi 0, %s254
      %s272 = sphi 0, %s272
      %s274 = sphi 0, %s272
      %s275 = sphi 0, %s274
      %s289 = sphi 0, %s275
      %s293 = sphi 0, %s293
      %s295 = sphi 0, %s293
      %s296 = sphi 0, %s295
      %s310 = sphi 0, %s296
      %s316 = sphi 0, %s318
      %s319 = sphi 0, %s316
      %s320 = sphi 0, %s319
      %s336 = sphi 0, %s320
    $region4: #{attention_block.1} parent=1 // loop_header_branch
      %31 = sbr.rel (%p29) target = $region8
    $region5: #{attention_block.1} parent=1 // loop_body
      %s33 = ssub.s32 %s28, 1
      %s34 = ssub.s32 %s28, 2
      %s35 = sadd.s32 %s28, 1
      %s36 = ssub.s32 %s28, %s35
      %p37 = scmp.eq.s32.totalorder %s36, 0
      %s39 = sadd.s32 %s38, 1
      %s40 = scalar_select %p37, %s38, %s39
      %p43 = pneg %p37
      %p44 = scmp.eq.s32.totalorder %s28, 1
      %p45 = por %p43, %p44
      %p46 = scmp.ne.s32.totalorder %s38, %s41
      %p47 = scmp.eq.s32.totalorder %s28, 0
      %p48 = por %p46, %p47
      %p49 = scmp.ne.s32.totalorder %s38, %s41
      %p50 = scmp.eq.s32.totalorder %s33, 1
      %p51 = por %p49, %p50
      %p52 = scmp.ne.s32.totalorder %s41, %s42
      %p53 = scmp.eq.s32.totalorder %s33, 0
      %p54 = por %p52, %p53
      %p55 = scmp.ne.s32.totalorder %s41, %s42
      %p56 = scmp.eq.s32.totalorder %s34, 1
      %p57 = por %p55, %p56
      %p59 = scmp.ne.s32.totalorder %s42, %s58
      %p60 = scmp.eq.s32.totalorder %s34, 0
      %p61 = por %p59, %p60
      %s63 = sadd.s32 %s62, 1
      %p66 = scmp.eq.s32.totalorder %s28, 1
      %p67 = scmp.ne.s32.totalorder %s62, %s64
      %p68 = scmp.eq.s32.totalorder %s28, 0
      %p69 = por %p67, %p68
      %p70 = scmp.ne.s32.totalorder %s62, %s64
      %p71 = scmp.eq.s32.totalorder %s33, 1
      %p72 = por %p70, %p71
      %p73 = scmp.ne.s32.totalorder %s64, %s65
      %p74 = scmp.eq.s32.totalorder %s33, 0
      %p75 = por %p73, %p74
      %p76 = scmp.ne.s32.totalorder %s64, %s65
      %p77 = scmp.eq.s32.totalorder %s34, 1
      %p78 = por %p76, %p77
      %p80 = scmp.ne.s32.totalorder %s65, %s79
      %p81 = scmp.eq.s32.totalorder %s34, 0
      %p82 = por %p80, %p81
      %s84 = sadd.s32 %s83, 1
      %p87 = scmp.eq.s32.totalorder %s28, 1
      %p88 = scmp.ne.s32.totalorder %s83, %s85
      %p89 = scmp.eq.s32.totalorder %s28, 0
      %p90 = por %p88, %p89
      %p91 = scmp.ne.s32.totalorder %s83, %s85
      %p92 = scmp.eq.s32.totalorder %s33, 1
      %p93 = por %p91, %p92
      %p94 = scmp.ne.s32.totalorder %s85, %s86
      %p95 = scmp.eq.s32.totalorder %s33, 0
      %p96 = por %p94, %p95
      %p97 = scmp.ne.s32.totalorder %s85, %s86
      %p98 = scmp.eq.s32.totalorder %s34, 1
      %p99 = por %p97, %p98
      %p101 = scmp.ne.s32.totalorder %s86, %s100
      %p102 = scmp.eq.s32.totalorder %s34, 0
      %p103 = por %p101, %p102
      %s105 = sadd.s32 %s104, 1
      %p108 = scmp.eq.s32.totalorder %s28, 1
      %p109 = scmp.ne.s32.totalorder %s104, %s106
      %p110 = scmp.eq.s32.totalorder %s28, 0
      %p111 = por %p109, %p110
      %p112 = scmp.ne.s32.totalorder %s104, %s106
      %p113 = scmp.eq.s32.totalorder %s33, 1
      %p114 = por %p112, %p113
      %p115 = scmp.ne.s32.totalorder %s106, %s107
      %p116 = scmp.eq.s32.totalorder %s33, 0
      %p117 = por %p115, %p116
      %p118 = scmp.ne.s32.totalorder %s106, %s107
      %p119 = scmp.eq.s32.totalorder %s34, 1
      %p120 = por %p118, %p119
      %p122 = scmp.ne.s32.totalorder %s107, %s121
      %p123 = scmp.eq.s32.totalorder %s34, 0
      %p124 = por %p122, %p123
      %s126 = sadd.s32 %s125, 1
      %p129 = scmp.eq.s32.totalorder %s28, 1
      %p130 = scmp.ne.s32.totalorder %s125, %s127
      %p131 = scmp.eq.s32.totalorder %s28, 0
      %p132 = por %p130, %p131
      %p133 = scmp.ne.s32.totalorder %s125, %s127
      %p134 = scmp.eq.s32.totalorder %s33, 1
      %p135 = por %p133, %p134
      %p136 = scmp.ne.s32.totalorder %s127, %s128
      %p137 = scmp.eq.s32.totalorder %s33, 0
      %p138 = por %p136, %p137
      %p139 = scmp.ne.s32.totalorder %s127, %s128
      %p140 = scmp.eq.s32.totalorder %s34, 1
      %p141 = por %p139, %p140
      %p143 = scmp.ne.s32.totalorder %s128, %s142
      %p144 = scmp.eq.s32.totalorder %s34, 0
      %p145 = por %p143, %p144
      %s147 = sadd.s32 %s146, 1
      %p150 = scmp.eq.s32.totalorder %s28, 1
      %p151 = scmp.ne.s32.totalorder %s146, %s148
      %p152 = scmp.eq.s32.totalorder %s28, 0
      %p153 = por %p151, %p152
      %p154 = scmp.ne.s32.totalorder %s146, %s148
      %p155 = scmp.eq.s32.totalorder %s33, 1
      %p156 = por %p154, %p155
      %p157 = scmp.ne.s32.totalorder %s148, %s149
      %p158 = scmp.eq.s32.totalorder %s33, 0
      %p159 = por %p157, %p158
      %p160 = scmp.ne.s32.totalorder %s148, %s149
      %p161 = scmp.eq.s32.totalorder %s34, 1
      %p162 = por %p160, %p161
      %p164 = scmp.ne.s32.totalorder %s149, %s163
      %p165 = scmp.eq.s32.totalorder %s34, 0
      %p166 = por %p164, %p165
      %s168 = sadd.s32 %s167, 1
      %p171 = scmp.eq.s32.totalorder %s28, 1
      %p172 = scmp.ne.s32.totalorder %s167, %s169
      %p173 = scmp.eq.s32.totalorder %s28, 0
      %p174 = por %p172, %p173
      %p175 = scmp.ne.s32.totalorder %s167, %s169
      %p176 = scmp.eq.s32.totalorder %s33, 1
      %p177 = por %p175, %p176
      %p178 = scmp.ne.s32.totalorder %s169, %s170
      %p179 = scmp.eq.s32.totalorder %s33, 0
      %p180 = por %p178, %p179
      %p181 = scmp.ne.s32.totalorder %s169, %s170
      %p182 = scmp.eq.s32.totalorder %s34, 1
      %p183 = por %p181, %p182
      %p185 = scmp.ne.s32.totalorder %s170, %s184
      %p186 = scmp.eq.s32.totalorder %s34, 0
      %p187 = por %p185, %p186
      %s189 = sadd.s32 %s188, 1
      %p192 = scmp.eq.s32.totalorder %s28, 1
      %p193 = scmp.ne.s32.totalorder %s188, %s190
      %p194 = scmp.eq.s32.totalorder %s28, 0
      %p195 = por %p193, %p194
      %p196 = scmp.ne.s32.totalorder %s188, %s190
      %p197 = scmp.eq.s32.totalorder %s33, 1
      %p198 = por %p196, %p197
      %p199 = scmp.ne.s32.totalorder %s190, %s191
      %p200 = scmp.eq.s32.totalorder %s33, 0
      %p201 = por %p199, %p200
      %p202 = scmp.ne.s32.totalorder %s190, %s191
      %p203 = scmp.eq.s32.totalorder %s34, 1
      %p204 = por %p202, %p203
      %p206 = scmp.ne.s32.totalorder %s191, %s205
      %p207 = scmp.eq.s32.totalorder %s34, 0
      %p208 = por %p206, %p207
      %s210 = sadd.s32 %s209, 1
      %p213 = scmp.eq.s32.totalorder %s28, 1
      %p214 = scmp.ne.s32.totalorder %s209, %s211
      %p215 = scmp.eq.s32.totalorder %s28, 0
      %p216 = por %p214, %p215
      %p217 = scmp.ne.s32.totalorder %s209, %s211
      %p218 = scmp.eq.s32.totalorder %s33, 1
      %p219 = por %p217, %p218
      %p220 = scmp.ne.s32.totalorder %s211, %s212
      %p221 = scmp.eq.s32.totalorder %s33, 0
      %p222 = por %p220, %p221
      %p223 = scmp.ne.s32.totalorder %s211, %s212
      %p224 = scmp.eq.s32.totalorder %s34, 1
      %p225 = por %p223, %p224
      %p227 = scmp.ne.s32.totalorder %s212, %s226
      %p228 = scmp.eq.s32.totalorder %s34, 0
      %p229 = por %p227, %p228
      %s231 = sadd.s32 %s230, 1
      %p234 = scmp.eq.s32.totalorder %s28, 1
      %p235 = scmp.ne.s32.totalorder %s230, %s232
      %p236 = scmp.eq.s32.totalorder %s28, 0
      %p237 = por %p235, %p236
      %p238 = scmp.ne.s32.totalorder %s230, %s232
      %p239 = scmp.eq.s32.totalorder %s33, 1
      %p240 = por %p238, %p239
      %p241 = scmp.ne.s32.totalorder %s232, %s233
      %p242 = scmp.eq.s32.totalorder %s33, 0
      %p243 = por %p241, %p242
      %p244 = scmp.ne.s32.totalorder %s232, %s233
      %p245 = scmp.eq.s32.totalorder %s34, 1
      %p246 = por %p244, %p245
      %p248 = scmp.ne.s32.totalorder %s233, %s247
      %p249 = scmp.eq.s32.totalorder %s34, 0
      %p250 = por %p248, %p249
      %s252 = sadd.s32 %s251, 1
      %p255 = scmp.eq.s32.totalorder %s28, 1
      %p256 = scmp.ne.s32.totalorder %s251, %s253
      %p257 = scmp.eq.s32.totalorder %s28, 0
      %p258 = por %p256, %p257
      %p259 = scmp.ne.s32.totalorder %s251, %s253
      %p260 = scmp.eq.s32.totalorder %s33, 1
      %p261 = por %p259, %p260
      %p262 = scmp.ne.s32.totalorder %s253, %s254
      %p263 = scmp.eq.s32.totalorder %s33, 0
      %p264 = por %p262, %p263
      %p265 = scmp.ne.s32.totalorder %s253, %s254
      %p266 = scmp.eq.s32.totalorder %s34, 1
      %p267 = por %p265, %p266
      %p269 = scmp.ne.s32.totalorder %s254, %s268
      %p270 = scmp.eq.s32.totalorder %s34, 0
      %p271 = por %p269, %p270
      %s273 = sadd.s32 %s272, 1
      %p276 = scmp.eq.s32.totalorder %s28, 1
      %p277 = scmp.ne.s32.totalorder %s272, %s274
      %p278 = scmp.eq.s32.totalorder %s28, 0
      %p279 = por %p277, %p278
      %p280 = scmp.ne.s32.totalorder %s272, %s274
      %p281 = scmp.eq.s32.totalorder %s33, 1
      %p282 = por %p280, %p281
      %p283 = scmp.ne.s32.totalorder %s274, %s275
      %p284 = scmp.eq.s32.totalorder %s33, 0
      %p285 = por %p283, %p284
      %p286 = scmp.ne.s32.totalorder %s274, %s275
      %p287 = scmp.eq.s32.totalorder %s34, 1
      %p288 = por %p286, %p287
      %p290 = scmp.ne.s32.totalorder %s275, %s289
      %p291 = scmp.eq.s32.totalorder %s34, 0
      %p292 = por %p290, %p291
      %s294 = sadd.s32 %s293, 1
      %p297 = scmp.eq.s32.totalorder %s28, 1
      %p298 = scmp.ne.s32.totalorder %s293, %s295
      %p299 = scmp.eq.s32.totalorder %s28, 0
      %p300 = por %p298, %p299
      %p301 = scmp.ne.s32.totalorder %s293, %s295
      %p302 = scmp.eq.s32.totalorder %s33, 1
      %p303 = por %p301, %p302
      %p304 = scmp.ne.s32.totalorder %s295, %s296
      %p305 = scmp.eq.s32.totalorder %s33, 0
      %p306 = por %p304, %p305
      %p307 = scmp.ne.s32.totalorder %s295, %s296
      %p308 = scmp.eq.s32.totalorder %s34, 1
      %p309 = por %p307, %p308
      %p311 = scmp.ne.s32.totalorder %s296, %s310
      %p312 = scmp.eq.s32.totalorder %s34, 0
      %p313 = por %p311, %p312
      %s314 = ssub.s32 %s28, %s35
      %p315 = scmp.eq.s32.totalorder %s314, 0
      %s317 = sadd.s32 %s316, 1
      %s318 = scalar_select %p315, %s316, %s317
      %p321 = pneg %p315
      %p322 = scmp.eq.s32.totalorder %s28, 1
      %p323 = por %p321, %p322
      %p324 = scmp.ne.s32.totalorder %s316, %s319
      %p325 = scmp.eq.s32.totalorder %s28, 0
      %p326 = por %p324, %p325
      %p327 = scmp.ne.s32.totalorder %s316, %s319
      %p328 = scmp.eq.s32.totalorder %s33, 1
      %p329 = por %p327, %p328
      %p330 = scmp.ne.s32.totalorder %s319, %s320
      %p331 = scmp.eq.s32.totalorder %s33, 0
      %p332 = por %p330, %p331
      %p333 = scmp.ne.s32.totalorder %s319, %s320
      %p334 = scmp.eq.s32.totalorder %s34, 1
      %p335 = por %p333, %p334
      %p337 = scmp.ne.s32.totalorder %s320, %s336
      %p338 = scmp.eq.s32.totalorder %s34, 0
      %p339 = por %p337, %p338
      %p340 = scmp.le.s32.totalorder 1, %s28
      %p341 = scmp.lt.s32.totalorder %s28, 3
      %p342 = pnand %p340, %p341
      %p343 = pneg %p342
      // Predicated region
      $region9: #{attention_block.1} parent=5 // pred_check
        _
      $region10: #{attention_block.1} parent=5 // pred_check_branch
        %345 = sbr.rel (%p342) target = $region12
      $region11: #{attention_block.1} parent=5 // pred_region
        %s346 = ssub.s32 %s28, 1
        // Predicated region
        $region13: #{attention_block.1} parent=11 // pred_check
          %p347 = pneg %p75
        $region14: #{attention_block.1} parent=11 // pred_check_branch
          %349 = sbr.rel (%p347) target = $region16
        $region15: #{attention_block.1} parent=11 // pred_region
          %s351 = ssub.s32 3072, 3072
          %352 = vsyncadd [#allocation8], %s351
          %s353 = sshll.u32 [#allocation7], 4
          %s354 = int_to_ptr.vmem [resolvable:$true] %s353
          %359 = dma.hbm_to_vmem [thread:$0]  %s1, 3072, %s354, [#allocation8], 192, 192, 12
        $region16: #{attention_block.1} parent=11 // pred_fallthru
          _
        // Predicated region
        $region17: #{attention_block.1} parent=11 // pred_check
          %p360 = pneg %p96
        $region18: #{attention_block.1} parent=11 // pred_check_branch
          %362 = sbr.rel (%p360) target = $region20
        $region19: #{attention_block.1} parent=11 // pred_region
          _
        $region20: #{attention_block.1} parent=11 // pred_fallthru
          _
        // Predicated region
        $region21: #{attention_block.1} parent=11 // pred_check
          %p363 = pneg %p117
        $region22: #{attention_block.1} parent=11 // pred_check_branch
          %365 = sbr.rel (%p363) target = $region24
        $region23: #{attention_block.1} parent=11 // pred_region
          %s367 = ssub.s32 1024, 1024
          %368 = vsyncadd [#allocation8], %s367
          %s369 = sshll.u32 [#allocation9], 4
          %s370 = int_to_ptr.vmem [resolvable:$true] %s369
          %375 = dma.hbm_to_vmem [thread:$0]  %s3, 1024, %s370, [#allocation8], 64, 64, 4
        $region24: #{attention_block.1} parent=11 // pred_fallthru
          _
        // Predicated region
        $region25: #{attention_block.1} parent=11 // pred_check
          %p376 = pneg %p138
        $region26: #{attention_block.1} parent=11 // pred_check_branch
          %378 = sbr.rel (%p376) target = $region28
        $region27: #{attention_block.1} parent=11 // pred_region
          _
        $region28: #{attention_block.1} parent=11 // pred_fallthru
          _
        // Predicated region
        $region29: #{attention_block.1} parent=11 // pred_check
          %p379 = pneg %p159
        $region30: #{attention_block.1} parent=11 // pred_check_branch
          %381 = sbr.rel (%p379) target = $region32
        $region31: #{attention_block.1} parent=11 // pred_region
          _
        $region32: #{attention_block.1} parent=11 // pred_fallthru
          _
        // Predicated region
        $region33: #{attention_block.1} parent=11 // pred_check
          %p382 = pneg %p180
        $region34: #{attention_block.1} parent=11 // pred_check_branch
          %384 = sbr.rel (%p382) target = $region36
        $region35: #{attention_block.1} parent=11 // pred_region
          _
        $region36: #{attention_block.1} parent=11 // pred_fallthru
          _
        // Predicated region
        $region37: #{attention_block.1} parent=11 // pred_check
          %p385 = pneg %p201
        $region38: #{attention_block.1} parent=11 // pred_check_branch
          %387 = sbr.rel (%p385) target = $region40
        $region39: #{attention_block.1} parent=11 // pred_region
          %s389 = ssub.s32 4096, 4096
          %390 = vsyncadd [#allocation11], %s389
          %s391 = sshll.u32 [#allocation10], 4
          %s392 = int_to_ptr.vmem [resolvable:$true] %s391
          %397 = dma.hbm_to_vmem [thread:$0]  %s7, 4096, %s392, [#allocation11], 256, 256, 16
        $region40: #{attention_block.1} parent=11 // pred_fallthru
          _
        // Predicated region
        $region41: #{attention_block.1} parent=11 // pred_check
          %p398 = pneg %p222
        $region42: #{attention_block.1} parent=11 // pred_check_branch
          %400 = sbr.rel (%p398) target = $region44
        $region43: #{attention_block.1} parent=11 // pred_region
          %s402 = ssub.s32 64, 64
          %403 = vsyncadd [#allocation11], %s402
          %s405 = sshll.u32 [#allocation12], 4
          %s406 = int_to_ptr.vmem [resolvable:$true] %s405
          %408 = dma.hbm_to_vmem [thread:$0]  %s8, 64, %s406, [#allocation11]
        $region44: #{attention_block.1} parent=11 // pred_fallthru
          _
        // Predicated region
        $region45: #{attention_block.1} parent=11 // pred_check
          %p409 = pneg %p243
        $region46: #{attention_block.1} parent=11 // pred_check_branch
          %411 = sbr.rel (%p409) target = $region48
        $region47: #{attention_block.1} parent=11 // pred_region
          %s413 = ssub.s32 4096, 4096
          %414 = vsyncadd [#allocation14], %s413
          %s415 = sshll.u32 [#allocation13], 4
          %s416 = int_to_ptr.vmem [resolvable:$true] %s415
          %421 = dma.hbm_to_vmem [thread:$0]  %s9, 4096, %s416, [#allocation14], 64, 64, 4
        $region48: #{attention_block.1} parent=11 // pred_fallthru
          _
        // Predicated region
        $region49: #{attention_block.1} parent=11 // pred_check
          %p422 = pneg %p264
        $region50: #{attention_block.1} parent=11 // pred_check_branch
          %424 = sbr.rel (%p422) target = $region52
        $region51: #{attention_block.1} parent=11 // pred_region
          _
        $region52: #{attention_block.1} parent=11 // pred_fallthru
          _
        // Predicated region
        $region53: #{attention_block.1} parent=11 // pred_check
          %p425 = pneg %p285
        $region54: #{attention_block.1} parent=11 // pred_check_branch
          %427 = sbr.rel (%p425) target = $region56
        $region55: #{attention_block.1} parent=11 // pred_region
          _
        $region56: #{attention_block.1} parent=11 // pred_fallthru
          _
        // Predicated region
        $region57: #{attention_block.1} parent=11 // pred_check
          %p428 = pneg %p306
        $region58: #{attention_block.1} parent=11 // pred_check_branch
          %430 = sbr.rel (%p428) target = $region60
        $region59: #{attention_block.1} parent=11 // pred_region
          _
        $region60: #{attention_block.1} parent=11 // pred_fallthru
          _
      $region12: #{attention_block.1} parent=5 // pred_fallthru
        _
      %p431 = scmp.lt.s32.totalorder %s28, 2
      // Predicated region
      $region61: #{attention_block.1} parent=5 // pred_check
        %p432 = pneg %p431
      $region62: #{attention_block.1} parent=5 // pred_check_branch
        %434 = sbr.rel (%p432) target = $region64
      $region63: #{attention_block.1} parent=5 // pred_region
        // Predicated region
        $region65: #{attention_block.1} parent=63 // pred_check
          %p435 = pneg %p48
        $region66: #{attention_block.1} parent=63 // pred_check_branch
          %437 = sbr.rel (%p435) target = $region68
        $region67: #{attention_block.1} parent=63 // pred_region
          %s438 = sand.u32 %s38, 1
          %s439 = scalar_lea.sflag [#allocation5], %s438
          %s440 = sand.u32 %s38, 1
          %s441 = smul.addr %s440, 8
          %s442 = scalar_lea.vmem [#allocation4], %s441
          %s444 = ssub.s32 128, 128
          %445 = vsyncadd %s439, %s444
          %s446 = smul.addr %s28, 128
          %s447 = scalar_lea.hbm %s0, %s446
          %s449 = sshll.u32 %s442, 4
          %s450 = int_to_ptr.vmem [resolvable:$true] %s449
          %452 = dma.hbm_to_vmem [thread:$0]  %s447, 128, %s450, %s439
        $region68: #{attention_block.1} parent=63 // pred_fallthru
          _
      $region64: #{attention_block.1} parent=5 // pred_fallthru
        _
      %p453 = scmp.le.s32.totalorder 1, %s28
      %p454 = scmp.lt.s32.totalorder %s28, 3
      %p455 = pnand %p453, %p454
      %p456 = pneg %p455
      // Predicated region
      $region69: #{attention_block.1} parent=5 // pred_check
        _
      $region70: #{attention_block.1} parent=5 // pred_check_branch
        %458 = sbr.rel (%p455) target = $region72
      $region71: #{attention_block.1} parent=5 // pred_region
        %s459 = ssub.s32 %s28, 1
        %s460 = sand.u32 %s41, 1
        %s461 = scalar_lea.sflag [#allocation5], %s460
        %s462 = sand.u32 %s41, 1
        %s463 = smul.addr %s462, 8
        %s464 = scalar_lea.vmem [#allocation4], %s463
        // Predicated region
        $region73: #{attention_block.1} parent=71 // pred_check
          %p465 = pneg %p54
        $region74: #{attention_block.1} parent=71 // pred_check_branch
          %467 = sbr.rel (%p465) target = $region76
        $region75: #{attention_block.1} parent=71 // pred_region
          %468 = dma.done %s461, 128
        $region76: #{attention_block.1} parent=71 // pred_fallthru
          _
        // Predicated region
        $region77: #{attention_block.1} parent=71 // pred_check
          %p469 = pneg %p75
        $region78: #{attention_block.1} parent=71 // pred_check_branch
          %471 = sbr.rel (%p469) target = $region80
        $region79: #{attention_block.1} parent=71 // pred_region
          %472 = dma.done [#allocation8], 3072
        $region80: #{attention_block.1} parent=71 // pred_fallthru
          _
        // Predicated region
        $region81: #{attention_block.1} parent=71 // pred_check
          %p473 = pneg %p117
        $region82: #{attention_block.1} parent=71 // pred_check_branch
          %475 = sbr.rel (%p473) target = $region84
        $region83: #{attention_block.1} parent=71 // pred_region
          %476 = dma.done [#allocation8], 1024
        $region84: #{attention_block.1} parent=71 // pred_fallthru
          _
        // Predicated region
        $region85: #{attention_block.1} parent=71 // pred_check
          %p477 = pneg %p201
        $region86: #{attention_block.1} parent=71 // pred_check_branch
          %479 = sbr.rel (%p477) target = $region88
        $region87: #{attention_block.1} parent=71 // pred_region
          %480 = dma.done [#allocation11], 4096
        $region88: #{attention_block.1} parent=71 // pred_fallthru
          _
        // Predicated region
        $region89: #{attention_block.1} parent=71 // pred_check
          %p481 = pneg %p222
        $region90: #{attention_block.1} parent=71 // pred_check_branch
          %483 = sbr.rel (%p481) target = $region92
        $region91: #{attention_block.1} parent=71 // pred_region
          %484 = dma.done [#allocation11], 64
        $region92: #{attention_block.1} parent=71 // pred_fallthru
          _
        // Predicated region
        $region93: #{attention_block.1} parent=71 // pred_check
          %p485 = pneg %p243
        $region94: #{attention_block.1} parent=71 // pred_check_branch
          %487 = sbr.rel (%p485) target = $region96
        $region95: #{attention_block.1} parent=71 // pred_region
          %488 = dma.done [#allocation14], 4096
        $region96: #{attention_block.1} parent=71 // pred_fallthru
          _
        %s489 = sand.u32 %s41, 1
        %s490 = scalar_lea.sflag [#allocation5], %s489
        %s491 = sand.u32 %s41, 1
        %s492 = smul.addr %s491, 8
        %s493 = scalar_lea.vmem [#allocation4], %s492
        %p494 = pneg %p54
        %p495 = pneg %p51
        %p496 = pneg %p75
        %p497 = pneg %p72
        %p498 = pneg %p96
        %p499 = pneg %p93
        %p500 = pneg %p117
        %p501 = pneg %p114
        %p502 = pneg %p138
        %p503 = pneg %p135
        %p504 = pneg %p159
        %p505 = pneg %p156
        %p506 = pneg %p180
        %p507 = pneg %p177
        %p508 = pneg %p201
        %p509 = pneg %p198
        %p510 = pneg %p222
        %p511 = pneg %p219
        %p512 = pneg %p243
        %p513 = pneg %p240
        %p514 = pneg %p264
        %p515 = pneg %p261
        %p516 = pneg %p285
        %p517 = pneg %p282
        %p518 = pneg %p306
        %p519 = pneg %p303
        %p520 = pneg %p332
        %p521 = pneg %p329
        %s522 = sand.u32 %s319, 1
        %s523 = scalar_lea.sflag [#allocation6], %s522
        %s524 = sand.u32 %s319, 1
        %s525 = smul.addr %s524, 8
        %s526 = scalar_lea.vmem [#allocation15], %s525
        %v528 = vld [vmem:[%s464] sm:$0xff]
        %v529 = vld [vmem:[#allocation7] sm:$0xff]
        %v530 = vld [vmem:[#allocation7 + $0x8] sm:$0xf]
        %v531 = vld [vmem:[#allocation7 + $0xc] sm:$0xff]
        %v532 = vld [vmem:[#allocation7 + $0x14] sm:$0xf]
        %v533 = vld [vmem:[#allocation7 + $0x18] sm:$0xff]
        %v534 = vld [vmem:[#allocation7 + $0x20] sm:$0xf]
        %v535 = vld [vmem:[#allocation7 + $0x24] sm:$0xff]
        %v536 = vld [vmem:[#allocation7 + $0x2c] sm:$0xf]
        %v537 = vld [vmem:[#allocation7 + $0x30] sm:$0xff]
        %v538 = vld [vmem:[#allocation7 + $0x38] sm:$0xf]
        %v539 = vld [vmem:[#allocation7 + $0x3c] sm:$0xff]
        %v540 = vld [vmem:[#allocation7 + $0x44] sm:$0xf]
        %v541 = vld [vmem:[#allocation7 + $0x48] sm:$0xff]
        %v542 = vld [vmem:[#allocation7 + $0x50] sm:$0xf]
        %v543 = vld [vmem:[#allocation7 + $0x54] sm:$0xff]
        %v544 = vld [vmem:[#allocation7 + $0x5c] sm:$0xf]
        %v545 = vld [vmem:[#allocation7 + $0x60] sm:$0xff]
        %v546 = vld [vmem:[#allocation7 + $0x68] sm:$0xf]
        %v547 = vld [vmem:[#allocation7 + $0x6c] sm:$0xff]
        %v548 = vld [vmem:[#allocation7 + $0x74] sm:$0xf]
        %v549 = vld [vmem:[#allocation7 + $0x78] sm:$0xff]
        %v550 = vld [vmem:[#allocation7 + $0x80] sm:$0xf]
        %v551 = vld [vmem:[#allocation7 + $0x84] sm:$0xff]
        %v552 = vld [vmem:[#allocation7 + $0x8c] sm:$0xf]
        %v553 = vld [vmem:[#allocation7 + $0x90] sm:$0xff]
        %v554 = vld [vmem:[#allocation7 + $0x98] sm:$0xf]
        %v555 = vld [vmem:[#allocation7 + $0x9c] sm:$0xff]
        %v556 = vld [vmem:[#allocation7 + $0xa4] sm:$0xf]
        %v557 = vld [vmem:[#allocation7 + $0xa8] sm:$0xff]
        %v558 = vld [vmem:[#allocation7 + $0xb0] sm:$0xf]
        %v559 = vld [vmem:[#allocation7 + $0xb4] sm:$0xff]
        %v560 = vld [vmem:[#allocation7 + $0xbc] sm:$0xf]
        %v561 = vpack.c.bf16 %v528, %v528
        %v562 = vld [vmem:[%s2] sm:$0x7]
        %v564 = vlaneseq
        %v565 = vshrl.u32 %v564, 7
        %v566 = vsub.s32 0, %v565
        %v567 = vrot.slane %v562, %v566
        %v568 = vlaneseq
        %v569 = vshrl.u32 %v568, 7
        %v570 = vsub.s32 1, %v569
        %v571 = vrot.slane %v562, %v570
        %v572 = vlaneseq
        %v573 = vshrl.u32 %v572, 7
        %v574 = vsub.s32 2, %v573
        %v575 = vrot.slane %v562, %v574
        %v611 = vunpack.c.l.b16 %v529
        %v612 = vunpack.c.h.b16 %v529
        %v613 = vunpack.c.l.b16 %v530
        %v614 = vunpack.c.l.b16 %v531
        %v615 = vunpack.c.h.b16 %v531
        %v616 = vunpack.c.l.b16 %v532
        %v617 = vunpack.c.l.b16 %v533
        %v618 = vunpack.c.h.b16 %v533
        %v619 = vunpack.c.l.b16 %v534
        %v620 = vunpack.c.l.b16 %v535
        %v621 = vunpack.c.h.b16 %v535
        %v622 = vunpack.c.l.b16 %v536
        %v623 = vunpack.c.l.b16 %v537
        %v624 = vunpack.c.h.b16 %v537
        %v625 = vunpack.c.l.b16 %v538
        %v626 = vunpack.c.l.b16 %v539
        %v627 = vunpack.c.h.b16 %v539
        %v628 = vunpack.c.l.b16 %v540
        %v629 = vunpack.c.l.b16 %v541
        %v630 = vunpack.c.h.b16 %v541
        %v631 = vunpack.c.l.b16 %v542
        %v632 = vunpack.c.l.b16 %v543
        %v633 = vunpack.c.h.b16 %v543
        %v634 = vunpack.c.l.b16 %v544
        %v635 = vunpack.c.l.b16 %v545
        %v636 = vunpack.c.h.b16 %v545
        %v637 = vunpack.c.l.b16 %v546
        %v638 = vunpack.c.l.b16 %v547
        %v639 = vunpack.c.h.b16 %v547
        %v640 = vunpack.c.l.b16 %v548
        %v641 = vunpack.c.l.b16 %v549
        %v642 = vunpack.c.h.b16 %v549
        %v643 = vunpack.c.l.b16 %v550
        %v644 = vunpack.c.l.b16 %v551
        %v645 = vunpack.c.h.b16 %v551
        %v646 = vunpack.c.l.b16 %v552
        %v647 = vunpack.c.l.b16 %v553
        %v648 = vunpack.c.h.b16 %v553
        %v649 = vunpack.c.l.b16 %v554
        %v650 = vunpack.c.l.b16 %v555
        %v651 = vunpack.c.h.b16 %v555
        %v652 = vunpack.c.l.b16 %v556
        %v653 = vunpack.c.l.b16 %v557
        %v654 = vunpack.c.h.b16 %v557
        %v655 = vunpack.c.l.b16 %v558
        %v656 = vunpack.c.l.b16 %v559
        %v657 = vunpack.c.h.b16 %v559
        %v658 = vunpack.c.l.b16 %v560
        %v659 = vpack.c.b16 %v614, %v611
        %v660 = vpack.c.b16 %v615, %v612
        %v661 = vpack.c.b16 %v616, %v613
        %v662 = vpack.c.b16 %v620, %v617
        %v663 = vpack.c.b16 %v621, %v618
        %v664 = vpack.c.b16 %v622, %v619
        %v665 = vpack.c.b16 %v626, %v623
        %v666 = vpack.c.b16 %v627, %v624
        %v667 = vpack.c.b16 %v628, %v625
        %v668 = vpack.c.b16 %v632, %v629
        %v669 = vpack.c.b16 %v633, %v630
        %v670 = vpack.c.b16 %v634, %v631
        %v671 = vpack.c.b16 %v638, %v635
        %v672 = vpack.c.b16 %v639, %v636
        %v673 = vpack.c.b16 %v640, %v637
        %v674 = vpack.c.b16 %v644, %v641
        %v675 = vpack.c.b16 %v645, %v642
        %v676 = vpack.c.b16 %v646, %v643
        %v677 = vpack.c.b16 %v650, %v647
        %v678 = vpack.c.b16 %v651, %v648
        %v679 = vpack.c.b16 %v652, %v649
        %v680 = vpack.c.b16 %v656, %v653
        %v681 = vpack.c.b16 %v657, %v654
        %v682 = vpack.c.b16 %v658, %v655
        %707 = vmatprep.subr.bf16.mxu0 %v660
        %708 = vmatpush1.bf16.msra.mxu0 %v659
        %709 = vmatprep.subr.bf16.mxu0 %v663
        %710 = vmatpush1.bf16.msra.mxu0 %v662
        %711 = vmatprep.subr.bf16.mxu0 %v666
        %712 = vmatpush1.bf16.msra.mxu0 %v665
        %713 = vmatprep.subr.bf16.mxu0 %v669
        %714 = vmatpush1.bf16.msra.mxu0 %v668
        %715 = vmatprep.subr.bf16.mxu0 %v672
        %716 = vmatpush1.bf16.msra.mxu0 %v671
        %717 = vmatprep.subr.bf16.mxu0 %v675
        %718 = vmatpush1.bf16.msra.mxu0 %v674
        %719 = vmatprep.subr.bf16.mxu0 %v678
        %720 = vmatpush1.bf16.msra.mxu0 %v677
        %721 = vmatprep.subr.bf16.mxu0 %v681
        %722 = vmatpush1.bf16.msra.mxu0 %v680
        %723 = vmatprep.subr.bf16.mxu0 0
        %724 = vmatpush1.bf16.msra.mxu0 0
        %725 = vmatprep.subr.bf16.mxu0 0
        %726 = vmatpush1.bf16.msra.mxu0 0
        %727 = vmatprep.subr.bf16.mxu0 0
        %728 = vmatpush1.bf16.msra.mxu0 0
        %729 = vmatprep.subr.bf16.mxu0 0
        %730 = vmatpush1.bf16.msra.mxu0 0
        %731 = vmatprep.subr.bf16.mxu0 0
        %732 = vmatpush1.bf16.msra.mxu0 0
        %733 = vmatprep.subr.bf16.mxu0 0
        %734 = vmatpush1.bf16.msra.mxu0 0
        %735 = vmatprep.subr.bf16.mxu0 0
        %736 = vmatpush1.bf16.msra.mxu0 0
        %737 = vmatprep.subr.bf16.mxu0 0
        %738 = vmatpush1.bf16.msra.mxu0 0
        %739 = vmatprep.mubr.bf16.mxu0 0
        %740 = vmatmul.mubr.bf16.gmra.mrb[0].mxu0 %v561
        %v741 = vpop.f32.mrb[0].mxu0
        %v742 = vadd.f32 %v567, %v741
        %v743 = vpop.f32.mrb[0].mxu0
        %v744 = vadd.f32 %v571, %v743
        %v745 = vpop.f32.mrb[0].mxu0
        %v746 = vpop.f32.mrb[0].mxu0
        %747 = vdwg.mxu0
        %748 = vmatprep.subr.bf16.mxu0 0
        %749 = vmatpush1.bf16.msra.mxu0 %v661
        %750 = vmatprep.subr.bf16.mxu0 0
        %751 = vmatpush1.bf16.msra.mxu0 %v664
        %752 = vmatprep.subr.bf16.mxu0 0
        %753 = vmatpush1.bf16.msra.mxu0 %v667
        %754 = vmatprep.subr.bf16.mxu0 0
        %755 = vmatpush1.bf16.msra.mxu0 %v670
        %756 = vmatprep.subr.bf16.mxu0 0
        %757 = vmatpush1.bf16.msra.mxu0 %v673
        %758 = vmatprep.subr.bf16.mxu0 0
        %759 = vmatpush1.bf16.msra.mxu0 %v676
        %760 = vmatprep.subr.bf16.mxu0 0
        %761 = vmatpush1.bf16.msra.mxu0 %v679
        %762 = vmatprep.subr.bf16.mxu0 0
        %763 = vmatpush1.bf16.msra.mxu0 %v682
        %764 = vmatprep.subr.bf16.mxu0 0
        %765 = vmatpush1.bf16.msra.mxu0 0
        %766 = vmatprep.subr.bf16.mxu0 0
        %767 = vmatpush1.bf16.msra.mxu0 0
        %768 = vmatprep.subr.bf16.mxu0 0
        %769 = vmatpush1.bf16.msra.mxu0 0
        %770 = vmatprep.subr.bf16.mxu0 0
        %771 = vmatpush1.bf16.msra.mxu0 0
        %772 = vmatprep.subr.bf16.mxu0 0
        %773 = vmatpush1.bf16.msra.mxu0 0
        %774 = vmatprep.subr.bf16.mxu0 0
        %775 = vmatpush1.bf16.msra.mxu0 0
        %776 = vmatprep.subr.bf16.mxu0 0
        %777 = vmatpush1.bf16.msra.mxu0 0
        %778 = vmatprep.subr.bf16.mxu0 0
        %779 = vmatpush1.bf16.msra.mxu0 0
        %780 = vmatprep.mubr.bf16.mxu0 0
        %781 = vmatmul.mubr.bf16.gmra.mrb[0].mxu0 %v561
        %v782 = vpop.f32.mrb[0].mxu0
        %v783 = vadd.f32 %v575, %v782
        %v784 = vpop.f32.mrb[0].mxu0
        %v785 = vpop.f32.mrb[0].mxu0
        %v786 = vpop.f32.mrb[0].mxu0
        %787 = vdwg.mxu0
        %788 = vst [vmem:[#allocation2] sm:$0xff] %v742
        %789 = vst [vmem:[#allocation2 + $0x8] sm:$0xff] %v744
        %790 = vst [vmem:[#allocation2 + $0x10] sm:$0xff] %v783
        %v791 = vld [vmem:[#allocation2] sm:$0xff]
        %v792 = vld [vmem:[#allocation2 + $0x8] sm:$0xff]
        %v793 = vld [vmem:[#allocation2 + $0x10] sm:$0xff]
        %v794 = vpack.c.bf16 %v791, %v791
        %v795 = vpack.c.bf16 %v792, %v792
        %vm796 = vcmask 261120
        %v798 = vsel %vm796, %v794, 0
        %v801 = vsel %vm796, %v795, 0
        %803 = vmatprep.subr.bf16.mxu0 0
        %804 = vmatpush1.bf16.xpose.msra.mxu0 %v801
        %805 = vmatprep.subr.bf16.mxu0 0
        %806 = vmatpush1.bf16.xpose.msra.mxu0 0
        %807 = vmatprep.subr.bf16.mxu0 0
        %808 = vmatpush1.bf16.xpose.msra.mxu0 0
        %809 = vmatprep.subr.bf16.mxu0 0
        %810 = vmatpush1.bf16.xpose.msra.mxu0 0
        %811 = vmatprep.subr.bf16.mxu0 0
        %812 = vmatpush1.bf16.xpose.msra.mxu0 0
        %813 = vmatprep.subr.bf16.mxu0 0
        %814 = vmatpush1.bf16.xpose.msra.mxu0 0
        %815 = vmatprep.subr.bf16.mxu0 0
        %816 = vmatpush1.bf16.xpose.msra.mxu0 0
        %817 = vmatprep.subr.bf16.mxu0 0
        %818 = vmatpush1.bf16.xpose.msra.mxu0 0
        %819 = vmatprep.subr.bf16.mxu0 0
        %820 = vmatpush1.bf16.xpose.msra.mxu0 0
        %821 = vmatprep.subr.bf16.mxu0 0
        %822 = vmatpush1.bf16.xpose.msra.mxu0 0
        %823 = vmatprep.subr.bf16.mxu0 0
        %824 = vmatpush1.bf16.xpose.msra.mxu0 0
        %825 = vmatprep.subr.bf16.mxu0 0
        %826 = vmatpush1.bf16.xpose.msra.mxu0 0
        %827 = vmatprep.subr.bf16.mxu0 0
        %828 = vmatpush1.bf16.xpose.msra.mxu0 0
        %829 = vmatprep.subr.bf16.mxu0 0
        %830 = vmatpush1.bf16.xpose.msra.mxu0 0
        %831 = vmatprep.subr.bf16.mxu0 0
        %832 = vmatpush1.bf16.xpose.msra.mxu0 0
        %833 = vmatprep.subr.bf16.mxu0 0
        %834 = vmatpush1.bf16.xpose.msra.mxu0 0
        %835 = vmatprep.mubr.bf16.mxu0 0
        %836 = vmatmul.mubr.bf16.gmra.mrb[0].mxu0 %v798
        %v837 = vpop.f32.mrb[0].mxu0
        %v838 = vadd.f32 0.0, %v837
        %v839 = vpop.f32.mrb[0].mxu0
        %v840 = vpop.f32.mrb[0].mxu0
        %v841 = vpop.f32.mrb[0].mxu0
        %842 = vdwg.mxu0
        %vm843 = vcmask 64512
        %v844 = vsel %vm843, %v838, -inf
        %845 = vmax.xlane.f32.xlu0 %v844
        %v846 = vpop.xlane.xlu0 %845
        %v847 = vsub.f32 %v838, %v846
        %v848 = vmul.f32 %v847, 1.442695
        %v849 = vpow.pop %v848
        %v850 = vsel %vm843, %v849, 0.0
        %851 = vadd.xlane.f32.xlu0 %v850
        %v852 = vpop.xlane.xlu0 %851
        %v853 = vpack.c.bf16 %v849, %v849
        %v854 = vpack.c.bf16 %v793, %v793
        %v856 = vsel %vm843, %v853, 0
        %vm858 = vcmask 1043456
        %v860 = vsel %vm858, %v854, 0
        %862 = vmatprep.subr.bf16.mxu0 0
        %863 = vmatpush1.bf16.msra.mxu0 %v860
        %864 = vmatprep.subr.bf16.mxu0 0
        %865 = vmatpush1.bf16.msra.mxu0 0
        %866 = vmatprep.subr.bf16.mxu0 0
        %867 = vmatpush1.bf16.msra.mxu0 0
        %868 = vmatprep.subr.bf16.mxu0 0
        %869 = vmatpush1.bf16.msra.mxu0 0
        %870 = vmatprep.subr.bf16.mxu0 0
        %871 = vmatpush1.bf16.msra.mxu0 0
        %872 = vmatprep.subr.bf16.mxu0 0
        %873 = vmatpush1.bf16.msra.mxu0 0
        %874 = vmatprep.subr.bf16.mxu0 0
        %875 = vmatpush1.bf16.msra.mxu0 0
        %876 = vmatprep.subr.bf16.mxu0 0
        %877 = vmatpush1.bf16.msra.mxu0 0
        %878 = vmatprep.subr.bf16.mxu0 0
        %879 = vmatpush1.bf16.msra.mxu0 0
        %880 = vmatprep.subr.bf16.mxu0 0
        %881 = vmatpush1.bf16.msra.mxu0 0
        %882 = vmatprep.subr.bf16.mxu0 0
        %883 = vmatpush1.bf16.msra.mxu0 0
        %884 = vmatprep.subr.bf16.mxu0 0
        %885 = vmatpush1.bf16.msra.mxu0 0
        %886 = vmatprep.subr.bf16.mxu0 0
        %887 = vmatpush1.bf16.msra.mxu0 0
        %888 = vmatprep.subr.bf16.mxu0 0
        %889 = vmatpush1.bf16.msra.mxu0 0
        %890 = vmatprep.subr.bf16.mxu0 0
        %891 = vmatpush1.bf16.msra.mxu0 0
        %892 = vmatprep.subr.bf16.mxu0 0
        %893 = vmatpush1.bf16.msra.mxu0 0
        %894 = vmatprep.mubr.bf16.mxu0 0
        %895 = vmatmul.mubr.bf16.gmra.mrb[0].mxu0 %v856
        %v896 = vpop.f32.mrb[0].mxu0
        %v897 = vadd.f32 0.0, %v896
        %v898 = vpop.f32.mrb[0].mxu0
        %v899 = vpop.f32.mrb[0].mxu0
        %v900 = vpop.f32.mrb[0].mxu0
        %901 = vdwg.mxu0
        %v902 = vrcp.pop %v852
        %v903 = vmul.f32 %v897, %v902
        %904 = vst.msk [vmem:[#allocation3] sm:$0xff] %vm796, %v903
        %v905 = vld [vmem:[#allocation2] sm:$0xff]
        %v906 = vld [vmem:[#allocation2 + $0x8] sm:$0xff]
        %v907 = vld [vmem:[#allocation2 + $0x10] sm:$0xff]
        %v908 = vpack.c.bf16 %v905, %v905
        %v909 = vpack.c.bf16 %v906, %v906
        %911 = vrot.lane.b32.xlu0 %v908, 96
        %v912 = vpop.permute.xlu0 %911
        %914 = vrot.lane.b32.xlu0 %v909, 96
        %v915 = vpop.permute.xlu0 %914
        %v917 = vsel %vm796, %v912, 0
        %v920 = vsel %vm796, %v915, 0
        %922 = vmatprep.subr.bf16.mxu0 0
        %923 = vmatpush1.bf16.xpose.msra.mxu0 %v920
        %924 = vmatprep.subr.bf16.mxu0 0
        %925 = vmatpush1.bf16.xpose.msra.mxu0 0
        %926 = vmatprep.subr.bf16.mxu0 0
        %927 = vmatpush1.bf16.xpose.msra.mxu0 0
        %928 = vmatprep.subr.bf16.mxu0 0
        %929 = vmatpush1.bf16.xpose.msra.mxu0 0
        %930 = vmatprep.subr.bf16.mxu0 0
        %931 = vmatpush1.bf16.xpose.msra.mxu0 0
        %932 = vmatprep.subr.bf16.mxu0 0
        %933 = vmatpush1.bf16.xpose.msra.mxu0 0
        %934 = vmatprep.subr.bf16.mxu0 0
        %935 = vmatpush1.bf16.xpose.msra.mxu0 0
        %936 = vmatprep.subr.bf16.mxu0 0
        %937 = vmatpush1.bf16.xpose.msra.mxu0 0
        %938 = vmatprep.subr.bf16.mxu0 0
        %939 = vmatpush1.bf16.xpose.msra.mxu0 0
        %940 = vmatprep.subr.bf16.mxu0 0
        %941 = vmatpush1.bf16.xpose.msra.mxu0 0
        %942 = vmatprep.subr.bf16.mxu0 0
        %943 = vmatpush1.bf16.xpose.msra.mxu0 0
        %944 = vmatprep.subr.bf16.mxu0 0
        %945 = vmatpush1.bf16.xpose.msra.mxu0 0
        %946 = vmatprep.subr.bf16.mxu0 0
        %947 = vmatpush1.bf16.xpose.msra.mxu0 0
        %948 = vmatprep.subr.bf16.mxu0 0
        %949 = vmatpush1.bf16.xpose.msra.mxu0 0
        %950 = vmatprep.subr.bf16.mxu0 0
        %951 = vmatpush1.bf16.xpose.msra.mxu0 0
        %952 = vmatprep.subr.bf16.mxu0 0
        %953 = vmatpush1.bf16.xpose.msra.mxu0 0
        %954 = vmatprep.mubr.bf16.mxu0 0
        %955 = vmatmul.mubr.bf16.gmra.mrb[0].mxu0 %v917
        %v956 = vpop.f32.mrb[0].mxu0
        %v957 = vadd.f32 0.0, %v956
        %v958 = vpop.f32.mrb[0].mxu0
        %v959 = vpop.f32.mrb[0].mxu0
        %v960 = vpop.f32.mrb[0].mxu0
        %961 = vdwg.mxu0
        %v962 = vsel %vm843, %v957, -inf
        %963 = vmax.xlane.f32.xlu0 %v962
        %v964 = vpop.xlane.xlu0 %963
        %v965 = vsub.f32 %v957, %v964
        %v966 = vmul.f32 %v965, 1.442695
        %v967 = vpow.pop %v966
        %v968 = vsel %vm843, %v967, 0.0
        %969 = vadd.xlane.f32.xlu0 %v968
        %v970 = vpop.xlane.xlu0 %969
        %v971 = vpack.c.bf16 %v967, %v967
        %v972 = vpack.c.bf16 %v907, %v907
        %974 = vrot.lane.b32.xlu0 %v972, 96
        %v975 = vpop.permute.xlu0 %974
        %v977 = vsel %vm843, %v971, 0
        %v980 = vsel %vm858, %v975, 0
        %982 = vmatprep.subr.bf16.mxu0 0
        %983 = vmatpush1.bf16.msra.mxu0 %v980
        %984 = vmatprep.subr.bf16.mxu0 0
        %985 = vmatpush1.bf16.msra.mxu0 0
        %986 = vmatprep.subr.bf16.mxu0 0
        %987 = vmatpush1.bf16.msra.mxu0 0
        %988 = vmatprep.subr.bf16.mxu0 0
        %989 = vmatpush1.bf16.msra.mxu0 0
        %990 = vmatprep.subr.bf16.mxu0 0
        %991 = vmatpush1.bf16.msra.mxu0 0
        %992 = vmatprep.subr.bf16.mxu0 0
        %993 = vmatpush1.bf16.msra.mxu0 0
        %994 = vmatprep.subr.bf16.mxu0 0
        %995 = vmatpush1.bf16.msra.mxu0 0
        %996 = vmatprep.subr.bf16.mxu0 0
        %997 = vmatpush1.bf16.msra.mxu0 0
        %998 = vmatprep.subr.bf16.mxu0 0
        %999 = vmatpush1.bf16.msra.mxu0 0
        %1000 = vmatprep.subr.bf16.mxu0 0
        %1001 = vmatpush1.bf16.msra.mxu0 0
        %1002 = vmatprep.subr.bf16.mxu0 0
        %1003 = vmatpush1.bf16.msra.mxu0 0
        %1004 = vmatprep.subr.bf16.mxu0 0
        %1005 = vmatpush1.bf16.msra.mxu0 0
        %1006 = vmatprep.subr.bf16.mxu0 0
        %1007 = vmatpush1.bf16.msra.mxu0 0
        %1008 = vmatprep.subr.bf16.mxu0 0
        %1009 = vmatpush1.bf16.msra.mxu0 0
        %1010 = vmatprep.subr.bf16.mxu0 0
        %1011 = vmatpush1.bf16.msra.mxu0 0
        %1012 = vmatprep.subr.bf16.mxu0 0
        %1013 = vmatpush1.bf16.msra.mxu0 0
        %1014 = vmatprep.mubr.bf16.mxu0 0
        %1015 = vmatmul.mubr.bf16.gmra.mrb[0].mxu0 %v977
        %v1016 = vpop.f32.mrb[0].mxu0
        %v1017 = vadd.f32 0.0, %v1016
        %v1018 = vpop.f32.mrb[0].mxu0
        %v1019 = vpop.f32.mrb[0].mxu0
        %v1020 = vpop.f32.mrb[0].mxu0
        %1021 = vdwg.mxu0
        %v1022 = vrcp.pop %v970
        %v1023 = vmul.f32 %v1017, %v1022
        %1025 = vrot.lane.b32.xlu0 %v1023, 32
        %v1026 = vpop.permute.xlu0 %1025
        %vm1028 = vcmask 523520
        %1029 = vst.msk [vmem:[#allocation3] sm:$0xff] %vm1028, %v1026
        %v1030 = vld [vmem:[#allocation2] sm:$0xff]
        %v1031 = vld [vmem:[#allocation2 + $0x8] sm:$0xff]
        %v1032 = vld [vmem:[#allocation2 + $0x10] sm:$0xff]
        %v1033 = vpack.c.bf16 %v1030, %v1030
        %v1034 = vpack.c.bf16 %v1031, %v1031
        %1036 = vrot.lane.b32.xlu0 %v1033, 64
        %v1037 = vpop.permute.xlu0 %1036
        %1039 = vrot.lane.b32.xlu0 %v1034, 64
        %v1040 = vpop.permute.xlu0 %1039
        %v1042 = vsel %vm796, %v1037, 0
        %v1045 = vsel %vm796, %v1040, 0
        %1047 = vmatprep.subr.bf16.mxu0 0
        %1048 = vmatpush1.bf16.xpose.msra.mxu0 %v1045
        %1049 = vmatprep.subr.bf16.mxu0 0
        %1050 = vmatpush1.bf16.xpose.msra.mxu0 0
        %1051 = vmatprep.subr.bf16.mxu0 0
        %1052 = vmatpush1.bf16.xpose.msra.mxu0 0
        %1053 = vmatprep.subr.bf16.mxu0 0
        %1054 = vmatpush1.bf16.xpose.msra.mxu0 0
        %1055 = vmatprep.subr.bf16.mxu0 0
        %1056 = vmatpush1.bf16.xpose.msra.mxu0 0
        %1057 = vmatprep.subr.bf16.mxu0 0
        %1058 = vmatpush1.bf16.xpose.msra.mxu0 0
        %1059 = vmatprep.subr.bf16.mxu0 0
        %1060 = vmatpush1.bf16.xpose.msra.mxu0 0
        %1061 = vmatprep.subr.bf16.mxu0 0
        %1062 = vmatpush1.bf16.xpose.msra.mxu0 0
        %1063 = vmatprep.subr.bf16.mxu0 0
        %1064 = vmatpush1.bf16.xpose.msra.mxu0 0
        %1065 = vmatprep.subr.bf16.mxu0 0
        %1066 = vmatpush1.bf16.xpose.msra.mxu0 0
        %1067 = vmatprep.subr.bf16.mxu0 0
        %1068 = vmatpush1.bf16.xpose.msra.mxu0 0
        %1069 = vmatprep.subr.bf16.mxu0 0
        %1070 = vmatpush1.bf16.xpose.msra.mxu0 0
        %1071 = vmatprep.subr.bf16.mxu0 0
        %1072 = vmatpush1.bf16.xpose.msra.mxu0 0
        %1073 = vmatprep.subr.bf16.mxu0 0
        %1074 = vmatpush1.bf16.xpose.msra.mxu0 0
        %1075 = vmatprep.subr.bf16.mxu0 0
        %1076 = vmatpush1.bf16.xpose.msra.mxu0 0
        %1077 = vmatprep.subr.bf16.mxu0 0
        %1078 = vmatpush1.bf16.xpose.msra.mxu0 0
        %1079 = vmatprep.mubr.bf16.mxu0 0
        %1080 = vmatmul.mubr.bf16.gmra.mrb[0].mxu0 %v1042
        %v1081 = vpop.f32.mrb[0].mxu0
        %v1082 = vadd.f32 0.0, %v1081
        %v1083 = vpop.f32.mrb[0].mxu0
        %v1084 = vpop.f32.mrb[0].mxu0
        %v1085 = vpop.f32.mrb[0].mxu0
        %1086 = vdwg.mxu0
        %v1087 = vsel %vm843, %v1082, -inf
        %1088 = vmax.xlane.f32.xlu0 %v1087
        %v1089 = vpop.xlane.xlu0 %1088
        %v1090 = vsub.f32 %v1082, %v1089
        %v1091 = vmul.f32 %v1090, 1.442695
        %v1092 = vpow.pop %v1091
        %v1093 = vsel %vm843, %v1092, 0.0
        %1094 = vadd.xlane.f32.xlu0 %v1093
        %v1095 = vpop.xlane.xlu0 %1094
        %v1096 = vpack.c.bf16 %v1092, %v1092
        %v1097 = vpack.c.bf16 %v1032, %v1032
        %1099 = vrot.lane.b32.xlu0 %v1097, 64
        %v1100 = vpop.permute.xlu0 %1099
        %v1102 = vsel %vm843, %v1096, 0
        %v1105 = vsel %vm858, %v1100, 0
        %1107 = vmatprep.subr.bf16.mxu0 0
        %1108 = vmatpush1.bf16.msra.mxu0 %v1105
        %1109 = vmatprep.subr.bf16.mxu0 0
        %1110 = vmatpush1.bf16.msra.mxu0 0
        %1111 = vmatprep.subr.bf16.mxu0 0
        %1112 = vmatpush1.bf16.msra.mxu0 0
        %1113 = vmatprep.subr.bf16.mxu0 0
        %1114 = vmatpush1.bf16.msra.mxu0 0
        %1115 = vmatprep.subr.bf16.mxu0 0
        %1116 = vmatpush1.bf16.msra.mxu0 0
        %1117 = vmatprep.subr.bf16.mxu0 0
        %1118 = vmatpush1.bf16.msra.mxu0 0
        %1119 = vmatprep.subr.bf16.mxu0 0
        %1120 = vmatpush1.bf16.msra.mxu0 0
        %1121 = vmatprep.subr.bf16.mxu0 0
        %1122 = vmatpush1.bf16.msra.mxu0 0
        %1123 = vmatprep.subr.bf16.mxu0 0
        %1124 = vmatpush1.bf16.msra.mxu0 0
        %1125 = vmatprep.subr.bf16.mxu0 0
        %1126 = vmatpush1.bf16.msra.mxu0 0
        %1127 = vmatprep.subr.bf16.mxu0 0
        %1128 = vmatpush1.bf16.msra.mxu0 0
        %1129 = vmatprep.subr.bf16.mxu0 0
        %1130 = vmatpush1.bf16.msra.mxu0 0
        %1131 = vmatprep.subr.bf16.mxu0 0
        %1132 = vmatpush1.bf16.msra.mxu0 0
        %1133 = vmatprep.subr.bf16.mxu0 0
        %1134 = vmatpush1.bf16.msra.mxu0 0
        %1135 = vmatprep.subr.bf16.mxu0 0
        %1136 = vmatpush1.bf16.msra.mxu0 0
        %1137 = vmatprep.subr.bf16.mxu0 0
        %1138 = vmatpush1.bf16.msra.mxu0 0
        %1139 = vmatprep.mubr.bf16.mxu0 0
        %1140 = vmatmul.mubr.bf16.gmra.mrb[0].mxu0 %v1102
        %v1141 = vpop.f32.mrb[0].mxu0
        %v1142 = vadd.f32 0.0, %v1141
        %v1143 = vpop.f32.mrb[0].mxu0
        %v1144 = vpop.f32.mrb[0].mxu0
        %v1145 = vpop.f32.mrb[0].mxu0
        %1146 = vdwg.mxu0
        %v1147 = vrcp.pop %v1095
        %v1148 = vmul.f32 %v1142, %v1147
        %1150 = vrot.lane.b32.xlu0 %v1148, 64
        %v1151 = vpop.permute.xlu0 %1150
        %vm1153 = vcmask 785920
        %1154 = vst.msk [vmem:[#allocation3] sm:$0xff] %vm1153, %v1151
        %v1155 = vld [vmem:[#allocation2] sm:$0xff]
        %v1156 = vld [vmem:[#allocation2 + $0x8] sm:$0xff]
        %v1157 = vld [vmem:[#allocation2 + $0x10] sm:$0xff]
        %v1158 = vpack.c.bf16 %v1155, %v1155
        %v1159 = vpack.c.bf16 %v1156, %v1156
        %1161 = vrot.lane.b32.xlu0 %v1158, 32
        %v1162 = vpop.permute.xlu0 %1161
        %1164 = vrot.lane.b32.xlu0 %v1159, 32
        %v1165 = vpop.permute.xlu0 %1164
        %v1167 = vsel %vm796, %v1162, 0
        %v1170 = vsel %vm796, %v1165, 0
        %1172 = vmatprep.subr.bf16.mxu0 0
        %1173 = vmatpush1.bf16.xpose.msra.mxu0 %v1170
        %1174 = vmatprep.subr.bf16.mxu0 0
        %1175 = vmatpush1.bf16.xpose.msra.mxu0 0
        %1176 = vmatprep.subr.bf16.mxu0 0
        %1177 = vmatpush1.bf16.xpose.msra.mxu0 0
        %1178 = vmatprep.subr.bf16.mxu0 0
        %1179 = vmatpush1.bf16.xpose.msra.mxu0 0
        %1180 = vmatprep.subr.bf16.mxu0 0
        %1181 = vmatpush1.bf16.xpose.msra.mxu0 0
        %1182 = vmatprep.subr.bf16.mxu0 0
        %1183 = vmatpush1.bf16.xpose.msra.mxu0 0
        %1184 = vmatprep.subr.bf16.mxu0 0
        %1185 = vmatpush1.bf16.xpose.msra.mxu0 0
        %1186 = vmatprep.subr.bf16.mxu0 0
        %1187 = vmatpush1.bf16.xpose.msra.mxu0 0
        %1188 = vmatprep.subr.bf16.mxu0 0
        %1189 = vmatpush1.bf16.xpose.msra.mxu0 0
        %1190 = vmatprep.subr.bf16.mxu0 0
        %1191 = vmatpush1.bf16.xpose.msra.mxu0 0
        %1192 = vmatprep.subr.bf16.mxu0 0
        %1193 = vmatpush1.bf16.xpose.msra.mxu0 0
        %1194 = vmatprep.subr.bf16.mxu0 0
        %1195 = vmatpush1.bf16.xpose.msra.mxu0 0
        %1196 = vmatprep.subr.bf16.mxu0 0
        %1197 = vmatpush1.bf16.xpose.msra.mxu0 0
        %1198 = vmatprep.subr.bf16.mxu0 0
        %1199 = vmatpush1.bf16.xpose.msra.mxu0 0
        %1200 = vmatprep.subr.bf16.mxu0 0
        %1201 = vmatpush1.bf16.xpose.msra.mxu0 0
        %1202 = vmatprep.subr.bf16.mxu0 0
        %1203 = vmatpush1.bf16.xpose.msra.mxu0 0
        %1204 = vmatprep.mubr.bf16.mxu0 0
        %1205 = vmatmul.mubr.bf16.gmra.mrb[0].mxu0 %v1167
        %v1206 = vpop.f32.mrb[0].mxu0
        %v1207 = vadd.f32 0.0, %v1206
        %v1208 = vpop.f32.mrb[0].mxu0
        %v1209 = vpop.f32.mrb[0].mxu0
        %v1210 = vpop.f32.mrb[0].mxu0
        %1211 = vdwg.mxu0
        %v1212 = vsel %vm843, %v1207, -inf
        %1213 = vmax.xlane.f32.xlu0 %v1212
        %v1214 = vpop.xlane.xlu0 %1213
        %v1215 = vsub.f32 %v1207, %v1214
        %v1216 = vmul.f32 %v1215, 1.442695
        %v1217 = vpow.pop %v1216
        %v1218 = vsel %vm843, %v1217, 0.0
        %1219 = vadd.xlane.f32.xlu0 %v1218
        %v1220 = vpop.xlane.xlu0 %1219
        %v1221 = vpack.c.bf16 %v1217, %v1217
        %v1222 = vpack.c.bf16 %v1157, %v1157
        %1224 = vrot.lane.b32.xlu0 %v1222, 32
        %v1225 = vpop.permute.xlu0 %1224
        %v1227 = vsel %vm843, %v1221, 0
        %v1230 = vsel %vm858, %v1225, 0
        %1232 = vmatprep.subr.bf16.mxu0 0
        %1233 = vmatpush1.bf16.msra.mxu0 %v1230
        %1234 = vmatprep.subr.bf16.mxu0 0
        %1235 = vmatpush1.bf16.msra.mxu0 0
        %1236 = vmatprep.subr.bf16.mxu0 0
        %1237 = vmatpush1.bf16.msra.mxu0 0
        %1238 = vmatprep.subr.bf16.mxu0 0
        %1239 = vmatpush1.bf16.msra.mxu0 0
        %1240 = vmatprep.subr.bf16.mxu0 0
        %1241 = vmatpush1.bf16.msra.mxu0 0
        %1242 = vmatprep.subr.bf16.mxu0 0
        %1243 = vmatpush1.bf16.msra.mxu0 0
        %1244 = vmatprep.subr.bf16.mxu0 0
        %1245 = vmatpush1.bf16.msra.mxu0 0
        %1246 = vmatprep.subr.bf16.mxu0 0
        %1247 = vmatpush1.bf16.msra.mxu0 0
        %1248 = vmatprep.subr.bf16.mxu0 0
        %1249 = vmatpush1.bf16.msra.mxu0 0
        %1250 = vmatprep.subr.bf16.mxu0 0
        %1251 = vmatpush1.bf16.msra.mxu0 0
        %1252 = vmatprep.subr.bf16.mxu0 0
        %1253 = vmatpush1.bf16.msra.mxu0 0
        %1254 = vmatprep.subr.bf16.mxu0 0
        %1255 = vmatpush1.bf16.msra.mxu0 0
        %1256 = vmatprep.subr.bf16.mxu0 0
        %1257 = vmatpush1.bf16.msra.mxu0 0
        %1258 = vmatprep.subr.bf16.mxu0 0
        %1259 = vmatpush1.bf16.msra.mxu0 0
        %1260 = vmatprep.subr.bf16.mxu0 0
        %1261 = vmatpush1.bf16.msra.mxu0 0
        %1262 = vmatprep.subr.bf16.mxu0 0
        %1263 = vmatpush1.bf16.msra.mxu0 0
        %1264 = vmatprep.mubr.bf16.mxu0 0
        %1265 = vmatmul.mubr.bf16.gmra.mrb[0].mxu0 %v1227
        %v1266 = vpop.f32.mrb[0].mxu0
        %v1267 = vadd.f32 0.0, %v1266
        %v1268 = vpop.f32.mrb[0].mxu0
        %v1269 = vpop.f32.mrb[0].mxu0
        %v1270 = vpop.f32.mrb[0].mxu0
        %1271 = vdwg.mxu0
        %v1272 = vrcp.pop %v1220
        %v1273 = vmul.f32 %v1267, %v1272
        %1275 = vrot.lane.b32.xlu0 %v1273, 96
        %v1276 = vpop.permute.xlu0 %1275
        %vm1278 = vcmask 1048320
        %1279 = vst.msk [vmem:[#allocation3] sm:$0xff] %vm1278, %v1276
        %v1280 = vld [vmem:[#allocation3] sm:$0xff]
        %v1281 = vld [vmem:[#allocation9] sm:$0xf]
        %v1282 = vld [vmem:[#allocation9 + $0x4] sm:$0xf]
        %v1283 = vld [vmem:[#allocation9 + $0x8] sm:$0xf]
        %v1284 = vld [vmem:[#allocation9 + $0xc] sm:$0xf]
        %v1285 = vld [vmem:[#allocation9 + $0x10] sm:$0xf]
        %v1286 = vld [vmem:[#allocation9 + $0x14] sm:$0xf]
        %v1287 = vld [vmem:[#allocation9 + $0x18] sm:$0xf]
        %v1288 = vld [vmem:[#allocation9 + $0x1c] sm:$0xf]
        %v1289 = vld [vmem:[#allocation9 + $0x20] sm:$0xf]
        %v1290 = vld [vmem:[#allocation9 + $0x24] sm:$0xf]
        %v1291 = vld [vmem:[#allocation9 + $0x28] sm:$0xf]
        %v1292 = vld [vmem:[#allocation9 + $0x2c] sm:$0xf]
        %v1293 = vld [vmem:[#allocation9 + $0x30] sm:$0xf]
        %v1294 = vld [vmem:[#allocation9 + $0x34] sm:$0xf]
        %v1295 = vld [vmem:[#allocation9 + $0x38] sm:$0xf]
        %v1296 = vld [vmem:[#allocation9 + $0x3c] sm:$0xf]
        %v1297 = vpack.c.bf16 %v1280, %v1280
        %v1298 = vld [vmem:[%s4] sm:$0x1]
        %v1300 = vlaneseq
        %v1301 = vshrl.u32 %v1300, 7
        %v1302 = vsub.s32 0, %v1301
        %v1303 = vrot.slane %v1298, %v1302
        %v1321 = vunpack.c.l.b16 %v1281
        %v1322 = vunpack.c.l.b16 %v1282
        %v1323 = vunpack.c.l.b16 %v1283
        %v1324 = vunpack.c.l.b16 %v1284
        %v1325 = vunpack.c.l.b16 %v1285
        %v1326 = vunpack.c.l.b16 %v1286
        %v1327 = vunpack.c.l.b16 %v1287
        %v1328 = vunpack.c.l.b16 %v1288
        %v1329 = vunpack.c.l.b16 %v1289
        %v1330 = vunpack.c.l.b16 %v1290
        %v1331 = vunpack.c.l.b16 %v1291
        %v1332 = vunpack.c.l.b16 %v1292
        %v1333 = vunpack.c.l.b16 %v1293
        %v1334 = vunpack.c.l.b16 %v1294
        %v1335 = vunpack.c.l.b16 %v1295
        %v1336 = vunpack.c.l.b16 %v1296
        %v1337 = vpack.c.b16 %v1322, %v1321
        %v1338 = vpack.c.b16 %v1324, %v1323
        %v1339 = vpack.c.b16 %v1326, %v1325
        %v1340 = vpack.c.b16 %v1328, %v1327
        %v1341 = vpack.c.b16 %v1330, %v1329
        %v1342 = vpack.c.b16 %v1332, %v1331
        %v1343 = vpack.c.b16 %v1334, %v1333
        %v1344 = vpack.c.b16 %v1336, %v1335
        %1353 = vmatprep.subr.bf16.mxu0 0
        %1354 = vmatpush1.bf16.msra.mxu0 %v1337
        %1355 = vmatprep.subr.bf16.mxu0 0
        %1356 = vmatpush1.bf16.msra.mxu0 %v1338
        %1357 = vmatprep.subr.bf16.mxu0 0
        %1358 = vmatpush1.bf16.msra.mxu0 %v1339
        %1359 = vmatprep.subr.bf16.mxu0 0
        %1360 = vmatpush1.bf16.msra.mxu0 %v1340
        %1361 = vmatprep.subr.bf16.mxu0 0
        %1362 = vmatpush1.bf16.msra.mxu0 %v1341
        %1363 = vmatprep.subr.bf16.mxu0 0
        %1364 = vmatpush1.bf16.msra.mxu0 %v1342
        %1365 = vmatprep.subr.bf16.mxu0 0
        %1366 = vmatpush1.bf16.msra.mxu0 %v1343
        %1367 = vmatprep.subr.bf16.mxu0 0
        %1368 = vmatpush1.bf16.msra.mxu0 %v1344
        %1369 = vmatprep.subr.bf16.mxu0 0
        %1370 = vmatpush1.bf16.msra.mxu0 0
        %1371 = vmatprep.subr.bf16.mxu0 0
        %1372 = vmatpush1.bf16.msra.mxu0 0
        %1373 = vmatprep.subr.bf16.mxu0 0
        %1374 = vmatpush1.bf16.msra.mxu0 0
        %1375 = vmatprep.subr.bf16.mxu0 0
        %1376 = vmatpush1.bf16.msra.mxu0 0
        %1377 = vmatprep.subr.bf16.mxu0 0
        %1378 = vmatpush1.bf16.msra.mxu0 0
        %1379 = vmatprep.subr.bf16.mxu0 0
        %1380 = vmatpush1.bf16.msra.mxu0 0
        %1381 = vmatprep.subr.bf16.mxu0 0
        %1382 = vmatpush1.bf16.msra.mxu0 0
        %1383 = vmatprep.subr.bf16.mxu0 0
        %1384 = vmatpush1.bf16.msra.mxu0 0
        %1385 = vmatprep.mubr.bf16.mxu0 0
        %1386 = vmatmul.mubr.bf16.gmra.mrb[0].mxu0 %v1297
        %v1387 = vpop.f32.mrb[0].mxu0
        %v1388 = vadd.f32 %v1303, %v1387
        %v1389 = vpop.f32.mrb[0].mxu0
        %v1390 = vpop.f32.mrb[0].mxu0
        %v1391 = vpop.f32.mrb[0].mxu0
        %1392 = vdwg.mxu0
        %v1393 = vld [vmem:[%s464] sm:$0xff]
        %v1394 = vadd.f32 %v1393, %v1388
        %1395 = vadd.xlane.f32.xlu0 %v1394
        %v1396 = vpop.xlane.xlu0 %1395
        %v1397 = vrcp.pop 128.0
        %v1398 = vmul.f32 %v1396, %v1397
        %v1399 = vsub.f32 %v1394, %v1398
        %v1400 = vmul.f32 %v1399, %v1399
        %1401 = vadd.xlane.f32.xlu0 %v1400
        %v1402 = vpop.xlane.xlu0 %1401
        %v1403 = vmul.f32 %v1402, %v1397
        %v1404 = vadd.f32 %v1403, 1e-05
        %v1405 = vrsqrt.pop %v1404
        %v1406 = vmul.f32 %v1399, %v1405
        %v1407 = vld [vmem:[%s5] sm:$0x1]
        %v1409 = vlaneseq
        %v1410 = vshrl.u32 %v1409, 7
        %v1411 = vsub.s32 0, %v1410
        %v1412 = vrot.slane %v1407, %v1411
        %v1414 = vmul.f32 %v1406, %v1412
        %v1415 = vld [vmem:[%s6] sm:$0x1]
        %v1417 = vlaneseq
        %v1418 = vshrl.u32 %v1417, 7
        %v1419 = vsub.s32 0, %v1418
        %v1420 = vrot.slane %v1415, %v1419
        %v1422 = vadd.f32 %v1414, %v1420
        %v1423 = vld [vmem:[#allocation10] sm:$0xff]
        %v1424 = vld [vmem:[#allocation10 + $0x8] sm:$0xff]
        %v1425 = vld [vmem:[#allocation10 + $0x10] sm:$0xff]
        %v1426 = vld [vmem:[#allocation10 + $0x18] sm:$0xff]
        %v1427 = vld [vmem:[#allocation10 + $0x20] sm:$0xff]
        %v1428 = vld [vmem:[#allocation10 + $0x28] sm:$0xff]
        %v1429 = vld [vmem:[#allocation10 + $0x30] sm:$0xff]
        %v1430 = vld [vmem:[#allocation10 + $0x38] sm:$0xff]
        %v1431 = vld [vmem:[#allocation10 + $0x40] sm:$0xff]
        %v1432 = vld [vmem:[#allocation10 + $0x48] sm:$0xff]
        %v1433 = vld [vmem:[#allocation10 + $0x50] sm:$0xff]
        %v1434 = vld [vmem:[#allocation10 + $0x58] sm:$0xff]
        %v1435 = vld [vmem:[#allocation10 + $0x60] sm:$0xff]
        %v1436 = vld [vmem:[#allocation10 + $0x68] sm:$0xff]
        %v1437 = vld [vmem:[#allocation10 + $0x70] sm:$0xff]
        %v1438 = vld [vmem:[#allocation10 + $0x78] sm:$0xff]
        %v1439 = vld [vmem:[#allocation10 + $0x80] sm:$0xff]
        %v1440 = vld [vmem:[#allocation10 + $0x88] sm:$0xff]
        %v1441 = vld [vmem:[#allocation10 + $0x90] sm:$0xff]
        %v1442 = vld [vmem:[#allocation10 + $0x98] sm:$0xff]
        %v1443 = vld [vmem:[#allocation10 + $0xa0] sm:$0xff]
        %v1444 = vld [vmem:[#allocation10 + $0xa8] sm:$0xff]
        %v1445 = vld [vmem:[#allocation10 + $0xb0] sm:$0xff]
        %v1446 = vld [vmem:[#allocation10 + $0xb8] sm:$0xff]
        %v1447 = vld [vmem:[#allocation10 + $0xc0] sm:$0xff]
        %v1448 = vld [vmem:[#allocation10 + $0xc8] sm:$0xff]
        %v1449 = vld [vmem:[#allocation10 + $0xd0] sm:$0xff]
        %v1450 = vld [vmem:[#allocation10 + $0xd8] sm:$0xff]
        %v1451 = vld [vmem:[#allocation10 + $0xe0] sm:$0xff]
        %v1452 = vld [vmem:[#allocation10 + $0xe8] sm:$0xff]
        %v1453 = vld [vmem:[#allocation10 + $0xf0] sm:$0xff]
        %v1454 = vld [vmem:[#allocation10 + $0xf8] sm:$0xff]
        %v1455 = vpack.c.bf16 %v1422, %v1422
        %v1456 = vld [vmem:[#allocation12] sm:$0xf]
        %v1458 = vlaneseq
        %v1459 = vshrl.u32 %v1458, 7
        %v1460 = vsub.s32 0, %v1459
        %v1461 = vrot.slane %v1456, %v1460
        %v1462 = vlaneseq
        %v1463 = vshrl.u32 %v1462, 7
        %v1464 = vsub.s32 1, %v1463
        %v1465 = vrot.slane %v1456, %v1464
        %v1466 = vlaneseq
        %v1467 = vshrl.u32 %v1466, 7
        %v1468 = vsub.s32 2, %v1467
        %v1469 = vrot.slane %v1456, %v1468
        %v1470 = vlaneseq
        %v1471 = vshrl.u32 %v1470, 7
        %v1472 = vsub.s32 3, %v1471
        %v1473 = vrot.slane %v1456, %v1472
        %v1510 = vunpack.c.l.b16 %v1423
        %v1511 = vunpack.c.h.b16 %v1423
        %v1512 = vunpack.c.l.b16 %v1424
        %v1513 = vunpack.c.h.b16 %v1424
        %v1514 = vunpack.c.l.b16 %v1425
        %v1515 = vunpack.c.h.b16 %v1425
        %v1516 = vunpack.c.l.b16 %v1426
        %v1517 = vunpack.c.h.b16 %v1426
        %v1518 = vunpack.c.l.b16 %v1427
        %v1519 = vunpack.c.h.b16 %v1427
        %v1520 = vunpack.c.l.b16 %v1428
        %v1521 = vunpack.c.h.b16 %v1428
        %v1522 = vunpack.c.l.b16 %v1429
        %v1523 = vunpack.c.h.b16 %v1429
        %v1524 = vunpack.c.l.b16 %v1430
        %v1525 = vunpack.c.h.b16 %v1430
        %v1526 = vunpack.c.l.b16 %v1431
        %v1527 = vunpack.c.h.b16 %v1431
        %v1528 = vunpack.c.l.b16 %v1432
        %v1529 = vunpack.c.h.b16 %v1432
        %v1530 = vunpack.c.l.b16 %v1433
        %v1531 = vunpack.c.h.b16 %v1433
        %v1532 = vunpack.c.l.b16 %v1434
        %v1533 = vunpack.c.h.b16 %v1434
        %v1534 = vunpack.c.l.b16 %v1435
        %v1535 = vunpack.c.h.b16 %v1435
        %v1536 = vunpack.c.l.b16 %v1436
        %v1537 = vunpack.c.h.b16 %v1436
        %v1538 = vunpack.c.l.b16 %v1437
        %v1539 = vunpack.c.h.b16 %v1437
        %v1540 = vunpack.c.l.b16 %v1438
        %v1541 = vunpack.c.h.b16 %v1438
        %v1542 = vunpack.c.l.b16 %v1439
        %v1543 = vunpack.c.h.b16 %v1439
        %v1544 = vunpack.c.l.b16 %v1440
        %v1545 = vunpack.c.h.b16 %v1440
        %v1546 = vunpack.c.l.b16 %v1441
        %v1547 = vunpack.c.h.b16 %v1441
        %v1548 = vunpack.c.l.b16 %v1442
        %v1549 = vunpack.c.h.b16 %v1442
        %v1550 = vunpack.c.l.b16 %v1443
        %v1551 = vunpack.c.h.b16 %v1443
        %v1552 = vunpack.c.l.b16 %v1444
        %v1553 = vunpack.c.h.b16 %v1444
        %v1554 = vunpack.c.l.b16 %v1445
        %v1555 = vunpack.c.h.b16 %v1445
        %v1556 = vunpack.c.l.b16 %v1446
        %v1557 = vunpack.c.h.b16 %v1446
        %v1558 = vunpack.c.l.b16 %v1447
        %v1559 = vunpack.c.h.b16 %v1447
        %v1560 = vunpack.c.l.b16 %v1448
        %v1561 = vunpack.c.h.b16 %v1448
        %v1562 = vunpack.c.l.b16 %v1449
        %v1563 = vunpack.c.h.b16 %v1449
        %v1564 = vunpack.c.l.b16 %v1450
        %v1565 = vunpack.c.h.b16 %v1450
        %v1566 = vunpack.c.l.b16 %v1451
        %v1567 = vunpack.c.h.b16 %v1451
        %v1568 = vunpack.c.l.b16 %v1452
        %v1569 = vunpack.c.h.b16 %v1452
        %v1570 = vunpack.c.l.b16 %v1453
        %v1571 = vunpack.c.h.b16 %v1453
        %v1572 = vunpack.c.l.b16 %v1454
        %v1573 = vunpack.c.h.b16 %v1454
        %v1574 = vpack.c.b16 %v1514, %v1510
        %v1575 = vpack.c.b16 %v1515, %v1511
        %v1576 = vpack.c.b16 %v1516, %v1512
        %v1577 = vpack.c.b16 %v1517, %v1513
        %v1578 = vpack.c.b16 %v1522, %v1518
        %v1579 = vpack.c.b16 %v1523, %v1519
        %v1580 = vpack.c.b16 %v1524, %v1520
        %v1581 = vpack.c.b16 %v1525, %v1521
        %v1582 = vpack.c.b16 %v1530, %v1526
        %v1583 = vpack.c.b16 %v1531, %v1527
        %v1584 = vpack.c.b16 %v1532, %v1528
        %v1585 = vpack.c.b16 %v1533, %v1529
        %v1586 = vpack.c.b16 %v1538, %v1534
        %v1587 = vpack.c.b16 %v1539, %v1535
        %v1588 = vpack.c.b16 %v1540, %v1536
        %v1589 = vpack.c.b16 %v1541, %v1537
        %v1590 = vpack.c.b16 %v1546, %v1542
        %v1591 = vpack.c.b16 %v1547, %v1543
        %v1592 = vpack.c.b16 %v1548, %v1544
        %v1593 = vpack.c.b16 %v1549, %v1545
        %v1594 = vpack.c.b16 %v1554, %v1550
        %v1595 = vpack.c.b16 %v1555, %v1551
        %v1596 = vpack.c.b16 %v1556, %v1552
        %v1597 = vpack.c.b16 %v1557, %v1553
        %v1598 = vpack.c.b16 %v1562, %v1558
        %v1599 = vpack.c.b16 %v1563, %v1559
        %v1600 = vpack.c.b16 %v1564, %v1560
        %v1601 = vpack.c.b16 %v1565, %v1561
        %v1602 = vpack.c.b16 %v1570, %v1566
        %v1603 = vpack.c.b16 %v1571, %v1567
        %v1604 = vpack.c.b16 %v1572, %v1568
        %v1605 = vpack.c.b16 %v1573, %v1569
        %1638 = vmatprep.subr.bf16.mxu0 %v1575
        %1639 = vmatpush1.bf16.msra.mxu0 %v1574
        %1640 = vmatprep.subr.bf16.mxu0 %v1579
        %1641 = vmatpush1.bf16.msra.mxu0 %v1578
        %1642 = vmatprep.subr.bf16.mxu0 %v1583
        %1643 = vmatpush1.bf16.msra.mxu0 %v1582
        %1644 = vmatprep.subr.bf16.mxu0 %v1587
        %1645 = vmatpush1.bf16.msra.mxu0 %v1586
        %1646 = vmatprep.subr.bf16.mxu0 %v1591
        %1647 = vmatpush1.bf16.msra.mxu0 %v1590
        %1648 = vmatprep.subr.bf16.mxu0 %v1595
        %1649 = vmatpush1.bf16.msra.mxu0 %v1594
        %1650 = vmatprep.subr.bf16.mxu0 %v1599
        %1651 = vmatpush1.bf16.msra.mxu0 %v1598
        %1652 = vmatprep.subr.bf16.mxu0 %v1603
        %1653 = vmatpush1.bf16.msra.mxu0 %v1602
        %1654 = vmatprep.subr.bf16.mxu0 0
        %1655 = vmatpush1.bf16.msra.mxu0 0
        %1656 = vmatprep.subr.bf16.mxu0 0
        %1657 = vmatpush1.bf16.msra.mxu0 0
        %1658 = vmatprep.subr.bf16.mxu0 0
        %1659 = vmatpush1.bf16.msra.mxu0 0
        %1660 = vmatprep.subr.bf16.mxu0 0
        %1661 = vmatpush1.bf16.msra.mxu0 0
        %1662 = vmatprep.subr.bf16.mxu0 0
        %1663 = vmatpush1.bf16.msra.mxu0 0
        %1664 = vmatprep.subr.bf16.mxu0 0
        %1665 = vmatpush1.bf16.msra.mxu0 0
        %1666 = vmatprep.subr.bf16.mxu0 0
        %1667 = vmatpush1.bf16.msra.mxu0 0
        %1668 = vmatprep.subr.bf16.mxu0 0
        %1669 = vmatpush1.bf16.msra.mxu0 0
        %1670 = vmatprep.mubr.bf16.mxu0 0
        %1671 = vmatmul.mubr.bf16.gmra.mrb[0].mxu0 %v1455
        %v1672 = vpop.f32.mrb[0].mxu0
        %v1673 = vadd.f32 %v1461, %v1672
        %v1674 = vpop.f32.mrb[0].mxu0
        %v1675 = vadd.f32 %v1465, %v1674
        %v1676 = vpop.f32.mrb[0].mxu0
        %v1677 = vpop.f32.mrb[0].mxu0
        %1678 = vdwg.mxu0
        %1679 = vmatprep.subr.bf16.mxu0 %v1577
        %1680 = vmatpush1.bf16.msra.mxu0 %v1576
        %1681 = vmatprep.subr.bf16.mxu0 %v1581
        %1682 = vmatpush1.bf16.msra.mxu0 %v1580
        %1683 = vmatprep.subr.bf16.mxu0 %v1585
        %1684 = vmatpush1.bf16.msra.mxu0 %v1584
        %1685 = vmatprep.subr.bf16.mxu0 %v1589
        %1686 = vmatpush1.bf16.msra.mxu0 %v1588
        %1687 = vmatprep.subr.bf16.mxu0 %v1593
        %1688 = vmatpush1.bf16.msra.mxu0 %v1592
        %1689 = vmatprep.subr.bf16.mxu0 %v1597
        %1690 = vmatpush1.bf16.msra.mxu0 %v1596
        %1691 = vmatprep.subr.bf16.mxu0 %v1601
        %1692 = vmatpush1.bf16.msra.mxu0 %v1600
        %1693 = vmatprep.subr.bf16.mxu0 %v1605
        %1694 = vmatpush1.bf16.msra.mxu0 %v1604
        %1695 = vmatprep.subr.bf16.mxu0 0
        %1696 = vmatpush1.bf16.msra.mxu0 0
        %1697 = vmatprep.subr.bf16.mxu0 0
        %1698 = vmatpush1.bf16.msra.mxu0 0
        %1699 = vmatprep.subr.bf16.mxu0 0
        %1700 = vmatpush1.bf16.msra.mxu0 0
        %1701 = vmatprep.subr.bf16.mxu0 0
        %1702 = vmatpush1.bf16.msra.mxu0 0
        %1703 = vmatprep.subr.bf16.mxu0 0
        %1704 = vmatpush1.bf16.msra.mxu0 0
        %1705 = vmatprep.subr.bf16.mxu0 0
        %1706 = vmatpush1.bf16.msra.mxu0 0
        %1707 = vmatprep.subr.bf16.mxu0 0
        %1708 = vmatpush1.bf16.msra.mxu0 0
        %1709 = vmatprep.subr.bf16.mxu0 0
        %1710 = vmatpush1.bf16.msra.mxu0 0
        %1711 = vmatprep.mubr.bf16.mxu0 0
        %1712 = vmatmul.mubr.bf16.gmra.mrb[0].mxu0 %v1455
        %v1713 = vpop.f32.mrb[0].mxu0
        %v1714 = vadd.f32 %v1469, %v1713
        %v1715 = vpop.f32.mrb[0].mxu0
        %v1716 = vadd.f32 %v1473, %v1715
        %v1717 = vpop.f32.mrb[0].mxu0
        %v1718 = vpop.f32.mrb[0].mxu0
        %1719 = vdwg.mxu0
        %v1720 = vmax.f32 %v1673, 0.0
        %v1721 = vmax.f32 %v1675, 0.0
        %v1722 = vmax.f32 %v1714, 0.0
        %v1723 = vmax.f32 %v1716, 0.0
        %v1724 = vld [vmem:[#allocation13] sm:$0xf]
        %v1725 = vld [vmem:[#allocation13 + $0x4] sm:$0xf]
        %v1726 = vld [vmem:[#allocation13 + $0x8] sm:$0xf]
        %v1727 = vld [vmem:[#allocation13 + $0xc] sm:$0xf]
        %v1728 = vld [vmem:[#allocation13 + $0x10] sm:$0xf]
        %v1729 = vld [vmem:[#allocation13 + $0x14] sm:$0xf]
        %v1730 = vld [vmem:[#allocation13 + $0x18] sm:$0xf]
        %v1731 = vld [vmem:[#allocation13 + $0x1c] sm:$0xf]
        %v1732 = vld [vmem:[#allocation13 + $0x20] sm:$0xf]
        %v1733 = vld [vmem:[#allocation13 + $0x24] sm:$0xf]
        %v1734 = vld [vmem:[#allocation13 + $0x28] sm:$0xf]
        %v1735 = vld [vmem:[#allocation13 + $0x2c] sm:$0xf]
        %v1736 = vld [vmem:[#allocation13 + $0x30] sm:$0xf]
        %v1737 = vld [vmem:[#allocation13 + $0x34] sm:$0xf]
        %v1738 = vld [vmem:[#allocation13 + $0x38] sm:$0xf]
        %v1739 = vld [vmem:[#allocation13 + $0x3c] sm:$0xf]
        %v1740 = vld [vmem:[#allocation13 + $0x40] sm:$0xf]
        %v1741 = vld [vmem:[#allocation13 + $0x44] sm:$0xf]
        %v1742 = vld [vmem:[#allocation13 + $0x48] sm:$0xf]
        %v1743 = vld [vmem:[#allocation13 + $0x4c] sm:$0xf]
        %v1744 = vld [vmem:[#allocation13 + $0x50] sm:$0xf]
        %v1745 = vld [vmem:[#allocation13 + $0x54] sm:$0xf]
        %v1746 = vld [vmem:[#allocation13 + $0x58] sm:$0xf]
        %v1747 = vld [vmem:[#allocation13 + $0x5c] sm:$0xf]
        %v1748 = vld [vmem:[#allocation13 + $0x60] sm:$0xf]
        %v1749 = vld [vmem:[#allocation13 + $0x64] sm:$0xf]
        %v1750 = vld [vmem:[#allocation13 + $0x68] sm:$0xf]
        %v1751 = vld [vmem:[#allocation13 + $0x6c] sm:$0xf]
        %v1752 = vld [vmem:[#allocation13 + $0x70] sm:$0xf]
        %v1753 = vld [vmem:[#allocation13 + $0x74] sm:$0xf]
        %v1754 = vld [vmem:[#allocation13 + $0x78] sm:$0xf]
        %v1755 = vld [vmem:[#allocation13 + $0x7c] sm:$0xf]
        %v1756 = vld [vmem:[#allocation13 + $0x80] sm:$0xf]
        %v1757 = vld [vmem:[#allocation13 + $0x84] sm:$0xf]
        %v1758 = vld [vmem:[#allocation13 + $0x88] sm:$0xf]
        %v1759 = vld [vmem:[#allocation13 + $0x8c] sm:$0xf]
        %v1760 = vld [vmem:[#allocation13 + $0x90] sm:$0xf]
        %v1761 = vld [vmem:[#allocation13 + $0x94] sm:$0xf]
        %v1762 = vld [vmem:[#allocation13 + $0x98] sm:$0xf]
        %v1763 = vld [vmem:[#allocation13 + $0x9c] sm:$0xf]
        %v1764 = vld [vmem:[#allocation13 + $0xa0] sm:$0xf]
        %v1765 = vld [vmem:[#allocation13 + $0xa4] sm:$0xf]
        %v1766 = vld [vmem:[#allocation13 + $0xa8] sm:$0xf]
        %v1767 = vld [vmem:[#allocation13 + $0xac] sm:$0xf]
        %v1768 = vld [vmem:[#allocation13 + $0xb0] sm:$0xf]
        %v1769 = vld [vmem:[#allocation13 + $0xb4] sm:$0xf]
        %v1770 = vld [vmem:[#allocation13 + $0xb8] sm:$0xf]
        %v1771 = vld [vmem:[#allocation13 + $0xbc] sm:$0xf]
        %v1772 = vld [vmem:[#allocation13 + $0xc0] sm:$0xf]
        %v1773 = vld [vmem:[#allocation13 + $0xc4] sm:$0xf]
        %v1774 = vld [vmem:[#allocation13 + $0xc8] sm:$0xf]
        %v1775 = vld [vmem:[#allocation13 + $0xcc] sm:$0xf]
        %v1776 = vld [vmem:[#allocation13 + $0xd0] sm:$0xf]
        %v1777 = vld [vmem:[#allocation13 + $0xd4] sm:$0xf]
        %v1778 = vld [vmem:[#allocation13 + $0xd8] sm:$0xf]
        %v1779 = vld [vmem:[#allocation13 + $0xdc] sm:$0xf]
        %v1780 = vld [vmem:[#allocation13 + $0xe0] sm:$0xf]
        %v1781 = vld [vmem:[#allocation13 + $0xe4] sm:$0xf]
        %v1782 = vld [vmem:[#allocation13 + $0xe8] sm:$0xf]
        %v1783 = vld [vmem:[#allocation13 + $0xec] sm:$0xf]
        %v1784 = vld [vmem:[#allocation13 + $0xf0] sm:$0xf]
        %v1785 = vld [vmem:[#allocation13 + $0xf4] sm:$0xf]
        %v1786 = vld [vmem:[#allocation13 + $0xf8] sm:$0xf]
        %v1787 = vld [vmem:[#allocation13 + $0xfc] sm:$0xf]
        %v1788 = vpack.c.bf16 %v1720, %v1720
        %v1789 = vpack.c.bf16 %v1721, %v1721
        %v1790 = vpack.c.bf16 %v1722, %v1722
        %v1791 = vpack.c.bf16 %v1723, %v1723
        %v1792 = vld [vmem:[%s10] sm:$0x1]
        %v1794 = vlaneseq
        %v1795 = vshrl.u32 %v1794, 7
        %v1796 = vsub.s32 0, %v1795
        %v1797 = vrot.slane %v1792, %v1796
        %v1863 = vunpack.c.l.b16 %v1724
        %v1864 = vunpack.c.l.b16 %v1725
        %v1865 = vunpack.c.l.b16 %v1726
        %v1866 = vunpack.c.l.b16 %v1727
        %v1867 = vunpack.c.l.b16 %v1728
        %v1868 = vunpack.c.l.b16 %v1729
        %v1869 = vunpack.c.l.b16 %v1730
        %v1870 = vunpack.c.l.b16 %v1731
        %v1871 = vunpack.c.l.b16 %v1732
        %v1872 = vunpack.c.l.b16 %v1733
        %v1873 = vunpack.c.l.b16 %v1734
        %v1874 = vunpack.c.l.b16 %v1735
        %v1875 = vunpack.c.l.b16 %v1736
        %v1876 = vunpack.c.l.b16 %v1737
        %v1877 = vunpack.c.l.b16 %v1738
        %v1878 = vunpack.c.l.b16 %v1739
        %v1879 = vunpack.c.l.b16 %v1740
        %v1880 = vunpack.c.l.b16 %v1741
        %v1881 = vunpack.c.l.b16 %v1742
        %v1882 = vunpack.c.l.b16 %v1743
        %v1883 = vunpack.c.l.b16 %v1744
        %v1884 = vunpack.c.l.b16 %v1745
        %v1885 = vunpack.c.l.b16 %v1746
        %v1886 = vunpack.c.l.b16 %v1747
        %v1887 = vunpack.c.l.b16 %v1748
        %v1888 = vunpack.c.l.b16 %v1749
        %v1889 = vunpack.c.l.b16 %v1750
        %v1890 = vunpack.c.l.b16 %v1751
        %v1891 = vunpack.c.l.b16 %v1752
        %v1892 = vunpack.c.l.b16 %v1753
        %v1893 = vunpack.c.l.b16 %v1754
        %v1894 = vunpack.c.l.b16 %v1755
        %v1895 = vunpack.c.l.b16 %v1756
        %v1896 = vunpack.c.l.b16 %v1757
        %v1897 = vunpack.c.l.b16 %v1758
        %v1898 = vunpack.c.l.b16 %v1759
        %v1899 = vunpack.c.l.b16 %v1760
        %v1900 = vunpack.c.l.b16 %v1761
        %v1901 = vunpack.c.l.b16 %v1762
        %v1902 = vunpack.c.l.b16 %v1763
        %v1903 = vunpack.c.l.b16 %v1764
        %v1904 = vunpack.c.l.b16 %v1765
        %v1905 = vunpack.c.l.b16 %v1766
        %v1906 = vunpack.c.l.b16 %v1767
        %v1907 = vunpack.c.l.b16 %v1768
        %v1908 = vunpack.c.l.b16 %v1769
        %v1909 = vunpack.c.l.b16 %v1770
        %v1910 = vunpack.c.l.b16 %v1771
        %v1911 = vunpack.c.l.b16 %v1772
        %v1912 = vunpack.c.l.b16 %v1773
        %v1913 = vunpack.c.l.b16 %v1774
        %v1914 = vunpack.c.l.b16 %v1775
        %v1915 = vunpack.c.l.b16 %v1776
        %v1916 = vunpack.c.l.b16 %v1777
        %v1917 = vunpack.c.l.b16 %v1778
        %v1918 = vunpack.c.l.b16 %v1779
        %v1919 = vunpack.c.l.b16 %v1780
        %v1920 = vunpack.c.l.b16 %v1781
        %v1921 = vunpack.c.l.b16 %v1782
        %v1922 = vunpack.c.l.b16 %v1783
        %v1923 = vunpack.c.l.b16 %v1784
        %v1924 = vunpack.c.l.b16 %v1785
        %v1925 = vunpack.c.l.b16 %v1786
        %v1926 = vunpack.c.l.b16 %v1787
        %v1927 = vpack.c.b16 %v1864, %v1863
        %v1928 = vpack.c.b16 %v1866, %v1865
        %v1929 = vpack.c.b16 %v1868, %v1867
        %v1930 = vpack.c.b16 %v1870, %v1869
        %v1931 = vpack.c.b16 %v1872, %v1871
        %v1932 = vpack.c.b16 %v1874, %v1873
        %v1933 = vpack.c.b16 %v1876, %v1875
        %v1934 = vpack.c.b16 %v1878, %v1877
        %v1935 = vpack.c.b16 %v1880, %v1879
        %v1936 = vpack.c.b16 %v1882, %v1881
        %v1937 = vpack.c.b16 %v1884, %v1883
        %v1938 = vpack.c.b16 %v1886, %v1885
        %v1939 = vpack.c.b16 %v1888, %v1887
        %v1940 = vpack.c.b16 %v1890, %v1889
        %v1941 = vpack.c.b16 %v1892, %v1891
        %v1942 = vpack.c.b16 %v1894, %v1893
        %v1943 = vpack.c.b16 %v1896, %v1895
        %v1944 = vpack.c.b16 %v1898, %v1897
        %v1945 = vpack.c.b16 %v1900, %v1899
        %v1946 = vpack.c.b16 %v1902, %v1901
        %v1947 = vpack.c.b16 %v1904, %v1903
        %v1948 = vpack.c.b16 %v1906, %v1905
        %v1949 = vpack.c.b16 %v1908, %v1907
        %v1950 = vpack.c.b16 %v1910, %v1909
        %v1951 = vpack.c.b16 %v1912, %v1911
        %v1952 = vpack.c.b16 %v1914, %v1913
        %v1953 = vpack.c.b16 %v1916, %v1915
        %v1954 = vpack.c.b16 %v1918, %v1917
        %v1955 = vpack.c.b16 %v1920, %v1919
        %v1956 = vpack.c.b16 %v1922, %v1921
        %v1957 = vpack.c.b16 %v1924, %v1923
        %v1958 = vpack.c.b16 %v1926, %v1925
        %1991 = vmatprep.subr.bf16.mxu0 0
        %1992 = vmatpush1.bf16.msra.mxu0 %v1927
        %1993 = vmatprep.subr.bf16.mxu0 0
        %1994 = vmatpush1.bf16.msra.mxu0 %v1928
        %1995 = vmatprep.subr.bf16.mxu0 0
        %1996 = vmatpush1.bf16.msra.mxu0 %v1929
        %1997 = vmatprep.subr.bf16.mxu0 0
        %1998 = vmatpush1.bf16.msra.mxu0 %v1930
        %1999 = vmatprep.subr.bf16.mxu0 0
        %2000 = vmatpush1.bf16.msra.mxu0 %v1931
        %2001 = vmatprep.subr.bf16.mxu0 0
        %2002 = vmatpush1.bf16.msra.mxu0 %v1932
        %2003 = vmatprep.subr.bf16.mxu0 0
        %2004 = vmatpush1.bf16.msra.mxu0 %v1933
        %2005 = vmatprep.subr.bf16.mxu0 0
        %2006 = vmatpush1.bf16.msra.mxu0 %v1934
        %2007 = vmatprep.subr.bf16.mxu0 0
        %2008 = vmatpush1.bf16.msra.mxu0 %v1935
        %2009 = vmatprep.subr.bf16.mxu0 0
        %2010 = vmatpush1.bf16.msra.mxu0 %v1936
        %2011 = vmatprep.subr.bf16.mxu0 0
        %2012 = vmatpush1.bf16.msra.mxu0 %v1937
        %2013 = vmatprep.subr.bf16.mxu0 0
        %2014 = vmatpush1.bf16.msra.mxu0 %v1938
        %2015 = vmatprep.subr.bf16.mxu0 0
        %2016 = vmatpush1.bf16.msra.mxu0 %v1939
        %2017 = vmatprep.subr.bf16.mxu0 0
        %2018 = vmatpush1.bf16.msra.mxu0 %v1940
        %2019 = vmatprep.subr.bf16.mxu0 0
        %2020 = vmatpush1.bf16.msra.mxu0 %v1941
        %2021 = vmatprep.subr.bf16.mxu0 0
        %2022 = vmatpush1.bf16.msra.mxu0 %v1942
        %2023 = vmatprep.mubr.bf16.mxu0 %v1789
        %2024 = vmatmul.mubr.bf16.gmra.mrb[0].mxu0 %v1788
        %v2025 = vpop.f32.mrb[0].mxu0
        %v2026 = vadd.f32 %v1797, %v2025
        %v2027 = vpop.f32.mrb[0].mxu0
        %v2028 = vpop.f32.mrb[0].mxu0
        %v2029 = vpop.f32.mrb[0].mxu0
        %2030 = vdwg.mxu0
        %2031 = vmatprep.subr.bf16.mxu0 0
        %2032 = vmatpush1.bf16.msra.mxu0 %v1943
        %2033 = vmatprep.subr.bf16.mxu0 0
        %2034 = vmatpush1.bf16.msra.mxu0 %v1944
        %2035 = vmatprep.subr.bf16.mxu0 0
        %2036 = vmatpush1.bf16.msra.mxu0 %v1945
        %2037 = vmatprep.subr.bf16.mxu0 0
        %2038 = vmatpush1.bf16.msra.mxu0 %v1946
        %2039 = vmatprep.subr.bf16.mxu0 0
        %2040 = vmatpush1.bf16.msra.mxu0 %v1947
        %2041 = vmatprep.subr.bf16.mxu0 0
        %2042 = vmatpush1.bf16.msra.mxu0 %v1948
        %2043 = vmatprep.subr.bf16.mxu0 0
        %2044 = vmatpush1.bf16.msra.mxu0 %v1949
        %2045 = vmatprep.subr.bf16.mxu0 0
        %2046 = vmatpush1.bf16.msra.mxu0 %v1950
        %2047 = vmatprep.subr.bf16.mxu0 0
        %2048 = vmatpush1.bf16.msra.mxu0 %v1951
        %2049 = vmatprep.subr.bf16.mxu0 0
        %2050 = vmatpush1.bf16.msra.mxu0 %v1952
        %2051 = vmatprep.subr.bf16.mxu0 0
        %2052 = vmatpush1.bf16.msra.mxu0 %v1953
        %2053 = vmatprep.subr.bf16.mxu0 0
        %2054 = vmatpush1.bf16.msra.mxu0 %v1954
        %2055 = vmatprep.subr.bf16.mxu0 0
        %2056 = vmatpush1.bf16.msra.mxu0 %v1955
        %2057 = vmatprep.subr.bf16.mxu0 0
        %2058 = vmatpush1.bf16.msra.mxu0 %v1956
        %2059 = vmatprep.subr.bf16.mxu0 0
        %2060 = vmatpush1.bf16.msra.mxu0 %v1957
        %2061 = vmatprep.subr.bf16.mxu0 0
        %2062 = vmatpush1.bf16.msra.mxu0 %v1958
        %2063 = vmatprep.mubr.bf16.mxu0 %v1791
        %2064 = vmatmul.mubr.bf16.gmra.mrb[0].mxu0 %v1790
        %v2065 = vpop.f32.mrb[0].mxu0
        %v2066 = vadd.f32 %v2026, %v2065
        %v2067 = vpop.f32.mrb[0].mxu0
        %v2068 = vpop.f32.mrb[0].mxu0
        %v2069 = vpop.f32.mrb[0].mxu0
        %2070 = vdwg.mxu0
        %v2071 = vadd.f32 %v1422, %v2066
        %2072 = vadd.xlane.f32.xlu0 %v2071
        %v2073 = vpop.xlane.xlu0 %2072
        %v2074 = vmul.f32 %v2073, %v1397
        %v2075 = vsub.f32 %v2071, %v2074
        %v2076 = vmul.f32 %v2075, %v2075
        %2077 = vadd.xlane.f32.xlu0 %v2076
        %v2078 = vpop.xlane.xlu0 %2077
        %v2079 = vmul.f32 %v2078, %v1397
        %v2080 = vadd.f32 %v2079, 1e-05
        %v2081 = vrsqrt.pop %v2080
        %v2082 = vmul.f32 %v2075, %v2081
        %v2083 = vld [vmem:[%s11] sm:$0x1]
        %v2085 = vlaneseq
        %v2086 = vshrl.u32 %v2085, 7
        %v2087 = vsub.s32 0, %v2086
        %v2088 = vrot.slane %v2083, %v2087
        %v2090 = vmul.f32 %v2082, %v2088
        %v2091 = vld [vmem:[%s12] sm:$0x1]
        %v2093 = vlaneseq
        %v2094 = vshrl.u32 %v2093, 7
        %v2095 = vsub.s32 0, %v2094
        %v2096 = vrot.slane %v2091, %v2095
        %v2098 = vadd.f32 %v2090, %v2096
        %2099 = vst [vmem:[%s526] sm:$0xff] %v2098
        %s2100 = sand.u32 %s319, 1
        %s2101 = scalar_lea.sflag [#allocation6], %s2100
        %s2102 = sand.u32 %s319, 1
        %s2103 = smul.addr %s2102, 8
        %s2104 = scalar_lea.vmem [#allocation15], %s2103
        // Predicated region
        $region97: #{attention_block.1} parent=71 // pred_check
          %p2105 = pneg %p329
        $region98: #{attention_block.1} parent=71 // pred_check_branch
          %2107 = sbr.rel (%p2105) target = $region100
        $region99: #{attention_block.1} parent=71 // pred_region
          %s2109 = ssub.s32 128, 128
          %2110 = vsyncadd %s2101, %s2109
          %s2111 = smul.addr %s33, 128
          %s2112 = scalar_lea.hbm %s13, %s2111
          %s2114 = sshll.u32 %s2104, 4
          %s2115 = int_to_ptr.vmem [resolvable:$true] %s2114
          %2117 = dma.vmem_to_hbm [thread:$0]  %s2115, 128, %s2112, %s2101
        $region100: #{attention_block.1} parent=71 // pred_fallthru
          _
      $region72: #{attention_block.1} parent=5 // pred_fallthru
        _
      %p2118 = scmp.le.s32.totalorder 2, %s28
      // Predicated region
      $region101: #{attention_block.1} parent=5 // pred_check
        %p2119 = pneg %p2118
      $region102: #{attention_block.1} parent=5 // pred_check_branch
        %2121 = sbr.rel (%p2119) target = $region104
      $region103: #{attention_block.1} parent=5 // pred_region
        %s2122 = ssub.s32 %s28, 2
        // Predicated region
        $region105: #{attention_block.1} parent=103 // pred_check
          %p2123 = pneg %p335
        $region106: #{attention_block.1} parent=103 // pred_check_branch
          %2125 = sbr.rel (%p2123) target = $region108
        $region107: #{attention_block.1} parent=103 // pred_region
          %s2126 = sand.u32 %s320, 1
          %s2127 = scalar_lea.sflag [#allocation6], %s2126
          %s2128 = sand.u32 %s320, 1
          %s2129 = smul.addr %s2128, 8
          %s2130 = scalar_lea.vmem [#allocation15], %s2129
          %2131 = dma.done %s2127, 128
        $region108: #{attention_block.1} parent=103 // pred_fallthru
          _
      $region104: #{attention_block.1} parent=5 // pred_fallthru
        _
    $region6: #{attention_block.1} parent=1 // loop_footer
      %s32 = sadd.s32 1, %s28
    $region7: #{attention_block.1} parent=1 // loop_footer_branch
      %27 = sbr.rel target = $region3
    $region8: #{attention_block.1} parent=1 // loop_exit
      _
    %2132 = vsyncpa [#allocation5], 1
    %s2133 = scalar_lea.sflag [#allocation5], 1
    %2134 = vsyncpa %s2133, 1
    %2135 = vsyncpa [#allocation8], 1
    %2136 = vsyncpa [#allocation11], 1
    %2137 = vsyncpa [#allocation14], 1
    %2138 = vsyncpa [#allocation6], 1
    %s2139 = scalar_lea.sflag [#allocation6], 1
    %2140 = vsyncpa %s2139, 1

</llo_original>
